<compile_context>
chip_gen: v7x
topology: tpu7x:2x2x1
jax: 0.10.0
libtpu: 0.0.40
codegen_flags: <defaults>
</compile_context>

<pallas_src>
import math
import functools

import numpy as np
import jax
import jax.numpy as jnp
from jax.experimental import pallas as pl
from jax.experimental.pallas import tpu as pltpu


# ---------------------------------------------------------------------------
# exact (erf-based) GELU, matching torch.nn.GELU() default.
# ---------------------------------------------------------------------------
def _erf(x):
    # Abramowitz & Stegun 7.1.26 rational approximation (|abs err| < 1.5e-7).
    # The denominator is an exact VALU divide: exp() already occupies the
    # single EUP slot in both GELU phases, and the approx-reciprocal's coarse
    # precision caused the previous parity failure.
    a1, a2, a3, a4, a5 = 0.254829592, -0.284496736, 1.421413741, -1.453152027, 1.061405429
    p = 0.3275911
    ax = jnp.abs(x)
    t = 1.0 / (1.0 + p * ax)
    poly = ((((a5 * t + a4) * t + a3) * t + a2) * t + a1) * t
    y = 1.0 - poly * jnp.exp(-ax * ax)
    return jnp.where(x >= 0, y, -y)


def _gelu(x):
    return 0.5 * x * (1.0 + _erf(x * 0.7071067811865476))


# ---------------------------------------------------------------------------
# One-time feature/direction probe for pltpu.roll along the sublane axis.
# Returns (shift_prev, shift_next) such that
#   pltpu.roll(v, shift_prev, axis=0)[r] == v[r-1]
#   pltpu.roll(v, shift_next, axis=0)[r] == v[r+1]
# or None if sublane rotation is unavailable here (use windowed reads instead).
# ---------------------------------------------------------------------------
@functools.lru_cache(maxsize=None)
def _sublane_roll_shifts(n_rows, n_cols):
    try:
        def probe(x_ref, o_ref):
            o_ref[...] = pltpu.roll(x_ref[...], 1, axis=0)

        x = jnp.tile(jnp.arange(n_rows, dtype=jnp.float32)[:, None], (1, n_cols))
        y = pl.pallas_call(
            probe, out_shape=jax.ShapeDtypeStruct((n_rows, n_cols), jnp.float32))(x)
        xh = np.asarray(jax.device_get(x))
        yh = np.asarray(jax.device_get(y))
    except Exception:                       # no sublane-roll lowering here
        return None
    if np.array_equal(yh, np.roll(xh, 1, axis=0)):     # jnp.roll semantics
        return 1, n_rows - 1
    if np.array_equal(yh, np.roll(xh, -1, axis=0)):    # opposite convention
        return n_rows - 1, 1
    return None


# ---------------------------------------------------------------------------
# Fused kernel: 1x1 conv (+folded BN) + GELU -> depthwise 3x3 (+folded BN) +
# GELU -> 1x1 conv (+folded BN).  One grid step processes `bblk` images.
# ---------------------------------------------------------------------------
def _leff_kernel(x_ref, w1_ref, t1_ref, wd_ref, t2_ref, w3_ref, t3_ref,
                 o_ref, p_ref, *, H, W, bblk, gap, roll_shifts):
    HW = H * W
    img_stride = HW + gap
    c_hid = w1_ref.shape[1]

    # ---- stage 1: pointwise conv (BN scale folded into weights) + GELU ----
    h = jnp.dot(x_ref[...], w1_ref[...], preferred_element_type=jnp.float32)
    h = _gelu(h + t1_ref[...])                               # (bblk*HW, Chid)

    # ---- stage the hidden activation into the per-image haloed scratch ----
    # Gap rows are re-zeroed every step: the scratch persists across grid
    # steps and a pid==0 guard would leave stale data on the second megacore.
    zgap = jnp.zeros((gap, c_hid), jnp.float32)
    for b in range(bblk + 1):
        p_ref[pl.ds(b * img_stride, gap), :] = zgap
    for b in range(bblk):
        p_ref[pl.ds(gap + b * img_stride, HW), :] = h[b * HW:(b + 1) * HW, :]

    # ---- depthwise 3x3 (BN scale folded).  Vertical taps read real zeros
    # from the halo rows; only the horizontal column-wrap masks remain.
    col = jax.lax.broadcasted_iota(jnp.int32, (HW, 1), 0) % W
    m_l = col != 0                 # x == 0 has no left neighbour
    m_r = col != (W - 1)           # x == W-1 has no right neighbour

    wd = wd_ref[...]                                          # (9, Chid)
    w_tap = [wd[i:i + 1, :] for i in range(9)]                # hoisted rows
    t2 = t2_ref[...]
    w3 = w3_ref[...]
    t3 = t3_ref[...]

    for b in range(bblk):
        base = gap + b * img_stride
        acc = None
        for dh in (-1, 0, 1):
            start = base + dh * W          # static, 8-aligned when W % 8 == 0
            band = p_ref[pl.ds(start, HW), :]
            if roll_shifts is not None:
                # dw = +-1 via XLU sublane rotations of the aligned band; the
                # column masks zero exactly the wrap positions.
                s_prev, s_next = roll_shifts
                prev_row = pltpu.roll(band, s_prev, axis=0)   # value at x-1
                next_row = pltpu.roll(band, s_next, axis=0)   # value at x+1
            else:
                # Safe fallback: +-1 sublane window reads from the scratch.
                prev_row = p_ref[pl.ds(start - 1, HW), :]
                next_row = p_ref[pl.ds(start + 1, HW), :]
            k = 3 * (dh + 1)
            term = (band * w_tap[k + 1]
                    + jnp.where(m_l, prev_row, 0.0) * w_tap[k]
                    + jnp.where(m_r, next_row, 0.0) * w_tap[k + 2])
            acc = term if acc is None else acc + term

        h2 = _gelu(acc + t2)

        # ---- stage 3: pointwise conv (BN scale folded) + shift -------------
        # Kept f32 on the MXU for parity with the f32 reference; bf16 inputs
        # with f32 accumulation are an optional v6e/v7x throughput trade.
        y = jnp.dot(h2, w3, preferred_element_type=jnp.float32)
        o_ref[pl.ds(b * HW, HW), :] = (y + t3).astype(o_ref.dtype)


# ---------------------------------------------------------------------------
# Wrapper helpers.
# ---------------------------------------------------------------------------
def _round_up(n, m):
    return ((n + m - 1) // m) * m


def _pick_batch_block(B, HW, c_in, c_hid_p, c_out, gap,
                      vmem_budget=24 * 1024 * 1024, max_blk=8):
    """Largest batch block that (a) divides B, (b) fits the VMEM budget with
    double-buffered I/O tiles, and (c) keeps >= 2 grid steps so v7x megacore
    sharding and the input/output DMA pipeline have work to overlap."""
    def footprint(blk):
        scratch = (blk * HW + (blk + 1) * gap) * c_hid_p * 4
        tiles = 2 * blk * HW * (c_in + c_out) * 4     # double-buffered in+out
        return scratch + tiles

    candidates = [c for c in range(1, min(B, max_blk) + 1)
                  if B % c == 0 and footprint(c) <= vmem_budget]
    if not candidates:
        return 1
    multi_step = [c for c in candidates if B // c >= 2]
    return max(multi_step) if multi_step else max(candidates)


def leff_forward(x, params):
    w1, t1, wd, t2, w3, t3 = params
    B, N, c_in = x.shape
    H = int(math.isqrt(N - 1))
    W = H
    assert H * W == N - 1, "token count must be 1 + square"
    HW = H * W
    c_hid = w1.shape[1]
    c_out = w3.shape[1]

    # Hidden channels padded to a lane-dense width (VMEM-only, zero HBM cost).
    # The OUTPUT channel dim is kept compact: padding 16->128 would write 8x
    # the HBM bytes and force a full-array slice pass afterwards.
    c_hid_p = _round_up(c_hid, 128)
    w1p = jnp.pad(w1, ((0, 0), (0, c_hid_p - c_hid)))
    t1p = jnp.pad(t1, ((0, 0), (0, c_hid_p - c_hid)))
    wdp = jnp.pad(wd, ((0, 0), (0, c_hid_p - c_hid)))
    t2p = jnp.pad(t2, ((0, 0), (0, c_hid_p - c_hid)))
    w3p = jnp.pad(w3, ((0, c_hid_p - c_hid), (0, 0)))

    gap = _round_up(W + 1, 8)          # per-image zero halo (covers +-1 reads)
    bblk = _pick_batch_block(B, HW, c_in, c_hid_p, c_out, gap)
    BHW = bblk * HW
    scratch_rows = bblk * HW + (bblk + 1) * gap

    roll_shifts = _sublane_roll_shifts(HW, c_hid_p)

    cls_tok = x[:, :1, :]
    tokens2d = x[:, 1:, :].reshape(B * HW, c_in)

    kernel = functools.partial(_leff_kernel, H=H, W=W, bblk=bblk, gap=gap,
                               roll_shifts=roll_shifts)

    def rep(a):                         # full-array operand, replicated
        return pl.BlockSpec(a.shape, lambda b: (0,) * a.ndim)

    weight_bytes = 4 * (w1p.size + t1p.size + wdp.size + t2p.size
                        + w3p.size + t3.size)
    tile_bytes = 4 * BHW * (c_in + c_out)
    scratch_bytes = 4 * scratch_rows * c_hid_p
    needed = scratch_bytes + 2 * tile_bytes + weight_bytes
    # derive the scoped-VMEM limit from the real buffer sizes with headroom
    # (v5e default is only 16 MiB); cap at the v7x physical 64 MiB.
    vmem_limit = int(min(64 * 1024 * 1024, max(32 * 1024 * 1024, 2 * needed)))

    flops = 2 * B * HW * (c_in * c_hid_p + 9 * c_hid_p + c_hid_p * c_out)
    transcendentals = 2 * B * HW * c_hid_p       # one exp per GELU phase
    bytes_accessed = 4 * B * HW * (c_in + c_out) + weight_bytes

    out2d = pl.pallas_call(
        kernel,
        out_shape=jax.ShapeDtypeStruct((B * HW, c_out), x.dtype),
        grid_spec=pltpu.PrefetchScalarGridSpec(
            num_scalar_prefetch=0,
            grid=(B // bblk,),
            in_specs=[
                pl.BlockSpec((BHW, c_in), lambda b: (b, 0)),
                rep(w1p), rep(t1p), rep(wdp), rep(t2p), rep(w3p), rep(t3),
            ],
            out_specs=pl.BlockSpec((BHW, c_out), lambda b: (b, 0)),
            scratch_shapes=[pltpu.VMEM((scratch_rows, c_hid_p), jnp.float32)],
        ),
        compiler_params=pltpu.CompilerParams(
            dimension_semantics=("parallel",),
            vmem_limit_bytes=vmem_limit),
        cost_estimate=pl.CostEstimate(
            flops=flops, transcendentals=transcendentals,
            bytes_accessed=bytes_accessed),
    )(tokens2d, w1p, t1p, wdp, t2p, w3p, t3)

    out_tokens = out2d.reshape(B, HW, c_out)
    return jnp.concatenate([cls_tok, out_tokens], axis=1)


# ---------------------------------------------------------------------------
# Deterministic parameter construction (shapes follow the nn.Module __init__),
# with conv bias + BatchNorm folded into per-channel scale (into the weights)
# and shift (inference-mode folding).
# ---------------------------------------------------------------------------
def make_params(key, c_in, c_hid, c_out, ksz=3, eps=1e-5):
    ks = jax.random.split(key, 18)
    conv1_w = jax.random.normal(ks[0], (c_hid, c_in, 1, 1, 1), jnp.float32) / math.sqrt(c_in)
    conv1_b = 0.1 * jax.random.normal(ks[1], (c_hid,), jnp.float32)
    conv2_w = jax.random.normal(ks[2], (c_hid, 1, ksz, ksz, ksz), jnp.float32) / ksz
    conv2_b = 0.1 * jax.random.normal(ks[3], (c_hid,), jnp.float32)
    conv3_w = jax.random.normal(ks[4], (c_out, c_hid, 1, 1, 1), jnp.float32) / math.sqrt(c_hid)
    conv3_b = 0.1 * jax.random.normal(ks[5], (c_out,), jnp.float32)

    def bn(k0, k1, k2, k3, c):
        gamma = 1.0 + 0.1 * jax.random.normal(k0, (c,), jnp.float32)
        beta = 0.1 * jax.random.normal(k1, (c,), jnp.float32)
        mean = 0.1 * jax.random.normal(k2, (c,), jnp.float32)
        var = jax.random.uniform(k3, (c,), jnp.float32, 0.5, 1.5)
        return gamma, beta, mean, var

    bn1 = bn(ks[6], ks[7], ks[8], ks[9], c_hid)
    bn2 = bn(ks[10], ks[11], ks[12], ks[13], c_hid)
    bn3 = bn(ks[14], ks[15], ks[16], ks[17], c_out)

    def fold(bias, gamma, beta, mean, var):
        scale = gamma / jnp.sqrt(var + eps)
        shift = (bias - mean) * scale + beta
        return scale, shift

    s1, t1 = fold(conv1_b, *bn1)
    s2, t2 = fold(conv2_b, *bn2)
    s3, t3 = fold(conv3_b, *bn3)

    w1 = conv1_w[:, :, 0, 0, 0].T * s1[None, :]                      # (Cin, Chid)
    # central depth slice of the depthwise 3x3x3 kernel (depth-1 input)
    wd = jnp.transpose(conv2_w[:, 0, ksz // 2, :, :], (1, 2, 0)).reshape(ksz * ksz, c_hid)
    wd = wd * s2[None, :]                                            # (9, Chid)
    w3 = conv3_w[:, :, 0, 0, 0].T * s3[None, :]                      # (Chid, Cout)
    return (w1, t1[None, :], wd, t2[None, :], w3, t3[None, :])


# ---------------------------------------------------------------------------
# Pure-JAX reference (same math, straightforward NHWC formulation).
# ---------------------------------------------------------------------------
def leff_reference(x, params):
    w1, t1, wd, t2, w3, t3 = params
    B, N, _ = x.shape
    H = int(math.isqrt(N - 1))
    W = H
    hp = jax.lax.Precision.HIGHEST
    cls_tok, tokens = x[:, :1, :], x[:, 1:, :]
    img = tokens.reshape(B, H, W, -1)

    h = jnp.einsum('bhwc,cd->bhwd', img, w1, precision=hp) + t1
    h = jax.nn.gelu(h, approximate=False)

    hpad = jnp.pad(h, ((0, 0), (1, 1), (1, 1), (0, 0)))
    acc = jnp.zeros_like(h)
    for dh in range(3):
        for dw in range(3):
            acc = acc + hpad[:, dh:dh + H, dw:dw + W, :] * wd[dh * 3 + dw]
    h2 = jax.nn.gelu(acc + t2, approximate=False)

    y = jnp.einsum('bhwd,de->bhwe', h2, w3, precision=hp) + t3
    return jnp.concatenate([cls_tok, y.reshape(B, H * W, -1)], axis=1)


if __name__ == "__main__":
    B, H, W = 2, 8, 8
    c_in, c_hid = 16, 32
    c_out = c_in                    # out_features defaults to in_features
    N = H * W + 1                   # 1 cls token + H*W patch tokens

    key = jax.random.PRNGKey(0)
    kx, kp = jax.random.split(key)
    x = jax.random.normal(kx, (B, N, c_in), jnp.float32)
    params = make_params(kp, c_in, c_hid, c_out)

    out = jax.block_until_ready(leff_forward(x, params))
    ref = jax.block_until_ready(leff_reference(x, params))

    assert out.shape == (B, N, c_out), out.shape
    err = float(jnp.max(jnp.abs(out - ref)))
    # The A&S erf approximation (|abs err| < 1.5e-7) is the only intentional
    # deviation from the exact-erf reference; everything else stays f32.
    if err > 5e-4:
        raise AssertionError(f"kernel/reference mismatch, max abs err = {err}")
    print("KERNEL_OK")
</pallas_src>

<mosaic_0001>
module attributes {stable_mosaic.version = 11 : i64} {
  func.func @probe(%arg0: memref<64x128xf32, #tpu.memory_space<vmem>>, %arg1: memref<64x128xf32, #tpu.memory_space<vmem>>) attributes {dimension_semantics = [], scalar_prefetch = 0 : i64, scratch_operands = 0 : i64, tpu.core_type = #tpu.core_type<tc>} {
    %c0 = arith.constant 0 : index
    %c0_0 = arith.constant 0 : index
    %0 = vector.load %arg0[%c0, %c0_0] : memref<64x128xf32, #tpu.memory_space<vmem>>, vector<64x128xf32>
    %c1_i32 = arith.constant 1 : i32
    %1 = tpu.dynamic_rotate %0 by %c1_i32 dim 0 : vector<64x128xf32>, i32 -> vector<64x128xf32>
    %c0_1 = arith.constant 0 : index
    %c0_2 = arith.constant 0 : index
    %2 = vector.load %arg1[%c0_1, %c0_2] : memref<64x128xf32, #tpu.memory_space<vmem>>, vector<64x128xf32>
    tpu.vector_store %arg1[%c0_1, %c0_2], %1 {strides = array<i32>} : memref<64x128xf32, #tpu.memory_space<vmem>>, vector<64x128xf32>,
    return
  }
}

module attributes {stable_mosaic.version = 11 : i64} {
  func.func @_leff_kernel(%arg0: i32, %arg1: memref<64x16xf32, #tpu.memory_space<vmem>>, %arg2: memref<16x128xf32, #tpu.memory_space<vmem>>, %arg3: memref<1x128xf32, #tpu.memory_space<vmem>>, %arg4: memref<9x128xf32, #tpu.memory_space<vmem>>, %arg5: memref<1x128xf32, #tpu.memory_space<vmem>>, %arg6: memref<128x16xf32, #tpu.memory_space<vmem>>, %arg7: memref<1x16xf32, #tpu.memory_space<vmem>>, %arg8: memref<64x16xf32, #tpu.memory_space<vmem>>, %arg9: memref<96x128xf32, #tpu.memory_space<vmem>>) attributes {dimension_semantics = [#tpu.dimension_semantics<parallel>], iteration_bounds = array<i64: 2>, scalar_prefetch = 0 : i64, scratch_operands = 1 : i64, tpu.core_type = #tpu.core_type<tc>, window_params = [{transform_indices = @transform_0, window_bounds = array<i64: 64, 16>}, {pipeline_mode = #tpu.pipeline_mode<synchronous>, transform_indices = @transform_1, window_bounds = array<i64: 16, 128>}, {pipeline_mode = #tpu.pipeline_mode<synchronous>, transform_indices = @transform_2, window_bounds = array<i64: 1, 128>}, {pipeline_mode = #tpu.pipeline_mode<synchronous>, transform_indices = @transform_3, window_bounds = array<i64: 9, 128>}, {pipeline_mode = #tpu.pipeline_mode<synchronous>, transform_indices = @transform_4, window_bounds = array<i64: 1, 128>}, {pipeline_mode = #tpu.pipeline_mode<synchronous>, transform_indices = @transform_5, window_bounds = array<i64: 128, 16>}, {pipeline_mode = #tpu.pipeline_mode<synchronous>, transform_indices = @transform_6, window_bounds = array<i64: 1, 16>}, {transform_indices = @transform_7, window_bounds = array<i64: 64, 16>}]} {
    %c0 = arith.constant 0 : index
    %c0_0 = arith.constant 0 : index
    %0 = vector.load %arg1[%c0, %c0_0] : memref<64x16xf32, #tpu.memory_space<vmem>>, vector<64x16xf32>
    %c0_1 = arith.constant 0 : index
    %c0_2 = arith.constant 0 : index
    %1 = vector.load %arg2[%c0_1, %c0_2] : memref<16x128xf32, #tpu.memory_space<vmem>>, vector<16x128xf32>
    %cst = arith.constant dense<0.000000e+00> : vector<64x128xf32>
    %2 = tpu.matmul %0, %1, %cst {dimension_numbers = #tpu.dot_dimension_numbers<[1], [0], [0], [1], [0, 0, 1, 1], [], []>} : vector<64x16xf32>, vector<16x128xf32>, vector<64x128xf32> -> vector<64x128xf32>
    %c0_3 = arith.constant 0 : index
    %c0_4 = arith.constant 0 : index
    %3 = vector.load %arg3[%c0_3, %c0_4] : memref<1x128xf32, #tpu.memory_space<vmem>>, vector<1x128xf32>
    %4 = vector.broadcast %3 : vector<1x128xf32> to vector<64x128xf32>
    %5 = arith.addf %2, %4 : vector<64x128xf32>
    %cst_5 = arith.constant 5.000000e-01 : f32
    %6 = vector.broadcast %cst_5 : f32 to vector<64x128xf32>
    %7 = arith.mulf %6, %5 : vector<64x128xf32>
    %cst_6 = arith.constant 0.707106769 : f32
    %8 = vector.broadcast %cst_6 : f32 to vector<64x128xf32>
    %9 = arith.mulf %5, %8 : vector<64x128xf32>
    %10 = math.absf %9 : vector<64x128xf32>
    %cst_7 = arith.constant 0.327591091 : f32
    %11 = vector.broadcast %cst_7 : f32 to vector<64x128xf32>
    %12 = arith.mulf %11, %10 : vector<64x128xf32>
    %cst_8 = arith.constant 1.000000e+00 : f32
    %13 = vector.broadcast %cst_8 : f32 to vector<64x128xf32>
    %14 = arith.addf %13, %12 : vector<64x128xf32>
    %cst_9 = arith.constant 1.000000e+00 : f32
    %15 = vector.broadcast %cst_9 : f32 to vector<64x128xf32>
    %16 = arith.divf %15, %14 : vector<64x128xf32>
    %cst_10 = arith.constant 1.06140542 : f32
    %17 = vector.broadcast %cst_10 : f32 to vector<64x128xf32>
    %18 = arith.mulf %17, %16 : vector<64x128xf32>
    %cst_11 = arith.constant -1.45315206 : f32
    %19 = vector.broadcast %cst_11 : f32 to vector<64x128xf32>
    %20 = arith.addf %18, %19 : vector<64x128xf32>
    %21 = arith.mulf %20, %16 : vector<64x128xf32>
    %cst_12 = arith.constant 1.42141378 : f32
    %22 = vector.broadcast %cst_12 : f32 to vector<64x128xf32>
    %23 = arith.addf %21, %22 : vector<64x128xf32>
    %24 = arith.mulf %23, %16 : vector<64x128xf32>
    %cst_13 = arith.constant -0.284496725 : f32
    %25 = vector.broadcast %cst_13 : f32 to vector<64x128xf32>
    %26 = arith.addf %24, %25 : vector<64x128xf32>
    %27 = arith.mulf %26, %16 : vector<64x128xf32>
    %cst_14 = arith.constant 0.254829586 : f32
    %28 = vector.broadcast %cst_14 : f32 to vector<64x128xf32>
    %29 = arith.addf %27, %28 : vector<64x128xf32>
    %30 = arith.mulf %29, %16 : vector<64x128xf32>
    %cst_15 = arith.constant 0.000000e+00 : f32
    %31 = vector.broadcast %cst_15 : f32 to vector<64x128xf32>
    %32 = arith.subf %31, %10 : vector<64x128xf32>
    %33 = arith.mulf %32, %10 : vector<64x128xf32>
    %34 = math.exp %33 : vector<64x128xf32>
    %35 = arith.mulf %30, %34 : vector<64x128xf32>
    %cst_16 = arith.constant 1.000000e+00 : f32
    %36 = vector.broadcast %cst_16 : f32 to vector<64x128xf32>
    %37 = arith.subf %36, %35 : vector<64x128xf32>
    %cst_17 = arith.constant 0.000000e+00 : f32
    %38 = vector.broadcast %cst_17 : f32 to vector<64x128xf32>
    %39 = arith.cmpf oge, %9, %38 : vector<64x128xf32>
    %cst_18 = arith.constant 0.000000e+00 : f32
    %40 = vector.broadcast %cst_18 : f32 to vector<64x128xf32>
    %41 = arith.subf %40, %37 : vector<64x128xf32>
    %42 = arith.select %39, %37, %41 : vector<64x128xi1>, vector<64x128xf32>
    %cst_19 = arith.constant 1.000000e+00 : f32
    %43 = vector.broadcast %cst_19 : f32 to vector<64x128xf32>
    %44 = arith.addf %43, %42 : vector<64x128xf32>
    %45 = arith.mulf %7, %44 : vector<64x128xf32>
    %cst_20 = arith.constant 0.000000e+00 : f32
    %46 = vector.broadcast %cst_20 : f32 to vector<16x128xf32>
    %c0_21 = arith.constant 0 : index
    %c0_22 = arith.constant 0 : index
    %47 = vector.load %arg9[%c0_21, %c0_22] : memref<96x128xf32, #tpu.memory_space<vmem>>, vector<16x128xf32>
    tpu.vector_store %arg9[%c0_21, %c0_22], %46 {strides = array<i32>} : memref<96x128xf32, #tpu.memory_space<vmem>>, vector<16x128xf32>,
    %c80 = arith.constant 80 : index
    %c0_23 = arith.constant 0 : index
    %48 = vector.load %arg9[%c80, %c0_23] : memref<96x128xf32, #tpu.memory_space<vmem>>, vector<16x128xf32>
    tpu.vector_store %arg9[%c80, %c0_23], %46 {strides = array<i32>} : memref<96x128xf32, #tpu.memory_space<vmem>>, vector<16x128xf32>,
    %c16 = arith.constant 16 : index
    %c0_24 = arith.constant 0 : index
    %49 = vector.load %arg9[%c16, %c0_24] : memref<96x128xf32, #tpu.memory_space<vmem>>, vector<64x128xf32>
    tpu.vector_store %arg9[%c16, %c0_24], %45 {strides = array<i32>} : memref<96x128xf32, #tpu.memory_space<vmem>>, vector<64x128xf32>,
    %50 = tpu.iota {dimensions = array<i32: 0>} : vector<64x1xi32>
    %c8_i32 = arith.constant 8 : i32
    %c0_i32 = arith.constant 0 : i32
    %51 = arith.cmpi eq, %c8_i32, %c0_i32 : i32
    %c1_i32 = arith.constant 1 : i32
    %52 = arith.select %51, %c1_i32, %c8_i32 : i32
    %53 = vector.broadcast %52 : i32 to vector<64x1xi32>
    %54 = arith.remsi %50, %53 : vector<64x1xi32>
    %c0_i32_25 = arith.constant 0 : i32
    %55 = vector.broadcast %c0_i32_25 : i32 to vector<64x1xi32>
    %56 = arith.cmpi ne, %54, %55 : vector<64x1xi32>
    %c0_i32_26 = arith.constant 0 : i32
    %57 = vector.broadcast %c0_i32_26 : i32 to vector<64x1xi32>
    %58 = arith.cmpi slt, %54, %57 : vector<64x1xi32>
    %c0_i32_27 = arith.constant 0 : i32
    %59 = arith.cmpi slt, %52, %c0_i32_27 : i32
    %60 = vector.broadcast %59 : i1 to vector<64x1xi1>
    %61 = vector.broadcast %60 : vector<64x1xi1> to vector<64x1xi1>
    %62 = arith.xori %58, %61 : vector<64x1xi1>
    %63 = arith.andi %62, %56 : vector<64x1xi1>
    %64 = vector.broadcast %52 : i32 to vector<64x1xi32>
    %65 = arith.addi %54, %64 : vector<64x1xi32>
    %66 = arith.select %63, %65, %54 : vector<64x1xi1>, vector<64x1xi32>
    %c0_i32_28 = arith.constant 0 : i32
    %67 = vector.broadcast %c0_i32_28 : i32 to vector<64x1xi32>
    %68 = arith.cmpi ne, %66, %67 : vector<64x1xi32>
    %c7_i32 = arith.constant 7 : i32
    %69 = vector.broadcast %c7_i32 : i32 to vector<64x1xi32>
    %70 = arith.cmpi ne, %66, %69 : vector<64x1xi32>
    %c0_29 = arith.constant 0 : index
    %c0_30 = arith.constant 0 : index
    %71 = vector.load %arg4[%c0_29, %c0_30] : memref<9x128xf32, #tpu.memory_space<vmem>>, vector<9x128xf32>
    %72 = vector.extract_strided_slice %71 {offsets = [0, 0], sizes = [1, 128], strides = [1, 1]} : vector<9x128xf32> to vector<1x128xf32>
    %73 = vector.extract_strided_slice %71 {offsets = [1, 0], sizes = [1, 128], strides = [1, 1]} : vector<9x128xf32> to vector<1x128xf32>
    %74 = vector.extract_strided_slice %71 {offsets = [2, 0], sizes = [1, 128], strides = [1, 1]} : vector<9x128xf32> to vector<1x128xf32>
    %75 = vector.extract_strided_slice %71 {offsets = [3, 0], sizes = [1, 128], strides = [1, 1]} : vector<9x128xf32> to vector<1x128xf32>
    %76 = vector.extract_strided_slice %71 {offsets = [4, 0], sizes = [1, 128], strides = [1, 1]} : vector<9x128xf32> to vector<1x128xf32>
    %77 = vector.extract_strided_slice %71 {offsets = [5, 0], sizes = [1, 128], strides = [1, 1]} : vector<9x128xf32> to vector<1x128xf32>
    %78 = vector.extract_strided_slice %71 {offsets = [6, 0], sizes = [1, 128], strides = [1, 1]} : vector<9x128xf32> to vector<1x128xf32>
    %79 = vector.extract_strided_slice %71 {offsets = [7, 0], sizes = [1, 128], strides = [1, 1]} : vector<9x128xf32> to vector<1x128xf32>
    %80 = vector.extract_strided_slice %71 {offsets = [8, 0], sizes = [1, 128], strides = [1, 1]} : vector<9x128xf32> to vector<1x128xf32>
    %c0_31 = arith.constant 0 : index
    %c0_32 = arith.constant 0 : index
    %81 = vector.load %arg5[%c0_31, %c0_32] : memref<1x128xf32, #tpu.memory_space<vmem>>, vector<1x128xf32>
    %c0_33 = arith.constant 0 : index
    %c0_34 = arith.constant 0 : index
    %82 = vector.load %arg6[%c0_33, %c0_34] : memref<128x16xf32, #tpu.memory_space<vmem>>, vector<128x16xf32>
    %c0_35 = arith.constant 0 : index
    %c0_36 = arith.constant 0 : index
    %83 = vector.load %arg7[%c0_35, %c0_36] : memref<1x16xf32, #tpu.memory_space<vmem>>, vector<1x16xf32>
    %c8 = arith.constant 8 : index
    %c0_37 = arith.constant 0 : index
    %84 = vector.load %arg9[%c8, %c0_37] : memref<96x128xf32, #tpu.memory_space<vmem>>, vector<64x128xf32>
    %c7 = arith.constant 7 : index
    %c0_38 = arith.constant 0 : index
    %85 = vector.load %arg9[%c7, %c0_38] : memref<96x128xf32, #tpu.memory_space<vmem>>, vector<64x128xf32>
    %c9 = arith.constant 9 : index
    %c0_39 = arith.constant 0 : index
    %86 = vector.load %arg9[%c9, %c0_39] : memref<96x128xf32, #tpu.memory_space<vmem>>, vector<64x128xf32>
    %87 = vector.broadcast %73 : vector<1x128xf32> to vector<64x128xf32>
    %88 = arith.mulf %84, %87 : vector<64x128xf32>
    %cst_40 = arith.constant 0.000000e+00 : f32
    %89 = vector.shape_cast %68 : vector<64x1xi1> to vector<64x1xi1>
    %90 = vector.broadcast %89 : vector<64x1xi1> to vector<64x128xi1>
    %91 = vector.broadcast %cst_40 : f32 to vector<64x128xf32>
    %92 = arith.select %90, %85, %91 : vector<64x128xi1>, vector<64x128xf32>
    %93 = vector.broadcast %72 : vector<1x128xf32> to vector<64x128xf32>
    %94 = arith.mulf %92, %93 : vector<64x128xf32>
    %95 = arith.addf %88, %94 : vector<64x128xf32>
    %cst_41 = arith.constant 0.000000e+00 : f32
    %96 = vector.shape_cast %70 : vector<64x1xi1> to vector<64x1xi1>
    %97 = vector.broadcast %96 : vector<64x1xi1> to vector<64x128xi1>
    %98 = vector.broadcast %cst_41 : f32 to vector<64x128xf32>
    %99 = arith.select %97, %86, %98 : vector<64x128xi1>, vector<64x128xf32>
    %100 = vector.broadcast %74 : vector<1x128xf32> to vector<64x128xf32>
    %101 = arith.mulf %99, %100 : vector<64x128xf32>
    %102 = arith.addf %95, %101 : vector<64x128xf32>
    %c16_42 = arith.constant 16 : index
    %c0_43 = arith.constant 0 : index
    %103 = vector.load %arg9[%c16_42, %c0_43] : memref<96x128xf32, #tpu.memory_space<vmem>>, vector<64x128xf32>
    %c15 = arith.constant 15 : index
    %c0_44 = arith.constant 0 : index
    %104 = vector.load %arg9[%c15, %c0_44] : memref<96x128xf32, #tpu.memory_space<vmem>>, vector<64x128xf32>
    %c17 = arith.constant 17 : index
    %c0_45 = arith.constant 0 : index
    %105 = vector.load %arg9[%c17, %c0_45] : memref<96x128xf32, #tpu.memory_space<vmem>>, vector<64x128xf32>
    %106 = vector.broadcast %76 : vector<1x128xf32> to vector<64x128xf32>
    %107 = arith.mulf %103, %106 : vector<64x128xf32>
    %cst_46 = arith.constant 0.000000e+00 : f32
    %108 = vector.shape_cast %68 : vector<64x1xi1> to vector<64x1xi1>
    %109 = vector.broadcast %108 : vector<64x1xi1> to vector<64x128xi1>
    %110 = vector.broadcast %cst_46 : f32 to vector<64x128xf32>
    %111 = arith.select %109, %104, %110 : vector<64x128xi1>, vector<64x128xf32>
    %112 = vector.broadcast %75 : vector<1x128xf32> to vector<64x128xf32>
    %113 = arith.mulf %111, %112 : vector<64x128xf32>
    %114 = arith.addf %107, %113 : vector<64x128xf32>
    %cst_47 = arith.constant 0.000000e+00 : f32
    %115 = vector.shape_cast %70 : vector<64x1xi1> to vector<64x1xi1>
    %116 = vector.broadcast %115 : vector<64x1xi1> to vector<64x128xi1>
    %117 = vector.broadcast %cst_47 : f32 to vector<64x128xf32>
    %118 = arith.select %116, %105, %117 : vector<64x128xi1>, vector<64x128xf32>
    %119 = vector.broadcast %77 : vector<1x128xf32> to vector<64x128xf32>
    %120 = arith.mulf %118, %119 : vector<64x128xf32>
    %121 = arith.addf %114, %120 : vector<64x128xf32>
    %122 = arith.addf %102, %121 : vector<64x128xf32>
    %c24 = arith.constant 24 : index
    %c0_48 = arith.constant 0 : index
    %123 = vector.load %arg9[%c24, %c0_48] : memref<96x128xf32, #tpu.memory_space<vmem>>, vector<64x128xf32>
    %c23 = arith.constant 23 : index
    %c0_49 = arith.constant 0 : index
    %124 = vector.load %arg9[%c23, %c0_49] : memref<96x128xf32, #tpu.memory_space<vmem>>, vector<64x128xf32>
    %c25 = arith.constant 25 : index
    %c0_50 = arith.constant 0 : index
    %125 = vector.load %arg9[%c25, %c0_50] : memref<96x128xf32, #tpu.memory_space<vmem>>, vector<64x128xf32>
    %126 = vector.broadcast %79 : vector<1x128xf32> to vector<64x128xf32>
    %127 = arith.mulf %123, %126 : vector<64x128xf32>
    %cst_51 = arith.constant 0.000000e+00 : f32
    %128 = vector.shape_cast %68 : vector<64x1xi1> to vector<64x1xi1>
    %129 = vector.broadcast %128 : vector<64x1xi1> to vector<64x128xi1>
    %130 = vector.broadcast %cst_51 : f32 to vector<64x128xf32>
    %131 = arith.select %129, %124, %130 : vector<64x128xi1>, vector<64x128xf32>
    %132 = vector.broadcast %78 : vector<1x128xf32> to vector<64x128xf32>
    %133 = arith.mulf %131, %132 : vector<64x128xf32>
    %134 = arith.addf %127, %133 : vector<64x128xf32>
    %cst_52 = arith.constant 0.000000e+00 : f32
    %135 = vector.shape_cast %70 : vector<64x1xi1> to vector<64x1xi1>
    %136 = vector.broadcast %135 : vector<64x1xi1> to vector<64x128xi1>
    %137 = vector.broadcast %cst_52 : f32 to vector<64x128xf32>
    %138 = arith.select %136, %125, %137 : vector<64x128xi1>, vector<64x128xf32>
    %139 = vector.broadcast %80 : vector<1x128xf32> to vector<64x128xf32>
    %140 = arith.mulf %138, %139 : vector<64x128xf32>
    %141 = arith.addf %134, %140 : vector<64x128xf32>
    %142 = arith.addf %122, %141 : vector<64x128xf32>
    %143 = vector.broadcast %81 : vector<1x128xf32> to vector<64x128xf32>
    %144 = arith.addf %142, %143 : vector<64x128xf32>
    %cst_53 = arith.constant 5.000000e-01 : f32
    %145 = vector.broadcast %cst_53 : f32 to vector<64x128xf32>
    %146 = arith.mulf %145, %144 : vector<64x128xf32>
    %cst_54 = arith.constant 0.707106769 : f32
    %147 = vector.broadcast %cst_54 : f32 to vector<64x128xf32>
    %148 = arith.mulf %144, %147 : vector<64x128xf32>
    %149 = math.absf %148 : vector<64x128xf32>
    %cst_55 = arith.constant 0.327591091 : f32
    %150 = vector.broadcast %cst_55 : f32 to vector<64x128xf32>
    %151 = arith.mulf %150, %149 : vector<64x128xf32>
    %cst_56 = arith.constant 1.000000e+00 : f32
    %152 = vector.broadcast %cst_56 : f32 to vector<64x128xf32>
    %153 = arith.addf %152, %151 : vector<64x128xf32>
    %cst_57 = arith.constant 1.000000e+00 : f32
    %154 = vector.broadcast %cst_57 : f32 to vector<64x128xf32>
    %155 = arith.divf %154, %153 : vector<64x128xf32>
    %cst_58 = arith.constant 1.06140542 : f32
    %156 = vector.broadcast %cst_58 : f32 to vector<64x128xf32>
    %157 = arith.mulf %156, %155 : vector<64x128xf32>
    %cst_59 = arith.constant -1.45315206 : f32
    %158 = vector.broadcast %cst_59 : f32 to vector<64x128xf32>
    %159 = arith.addf %157, %158 : vector<64x128xf32>
    %160 = arith.mulf %159, %155 : vector<64x128xf32>
    %cst_60 = arith.constant 1.42141378 : f32
    %161 = vector.broadcast %cst_60 : f32 to vector<64x128xf32>
    %162 = arith.addf %160, %161 : vector<64x128xf32>
    %163 = arith.mulf %162, %155 : vector<64x128xf32>
    %cst_61 = arith.constant -0.284496725 : f32
    %164 = vector.broadcast %cst_61 : f32 to vector<64x128xf32>
    %165 = arith.addf %163, %164 : vector<64x128xf32>
    %166 = arith.mulf %165, %155 : vector<64x128xf32>
    %cst_62 = arith.constant 0.254829586 : f32
    %167 = vector.broadcast %cst_62 : f32 to vector<64x128xf32>
    %168 = arith.addf %166, %167 : vector<64x128xf32>
    %169 = arith.mulf %168, %155 : vector<64x128xf32>
    %cst_63 = arith.constant 0.000000e+00 : f32
    %170 = vector.broadcast %cst_63 : f32 to vector<64x128xf32>
    %171 = arith.subf %170, %149 : vector<64x128xf32>
    %172 = arith.mulf %171, %149 : vector<64x128xf32>
    %173 = math.exp %172 : vector<64x128xf32>
    %174 = arith.mulf %169, %173 : vector<64x128xf32>
    %cst_64 = arith.constant 1.000000e+00 : f32
    %175 = vector.broadcast %cst_64 : f32 to vector<64x128xf32>
    %176 = arith.subf %175, %174 : vector<64x128xf32>
    %cst_65 = arith.constant 0.000000e+00 : f32
    %177 = vector.broadcast %cst_65 : f32 to vector<64x128xf32>
    %178 = arith.cmpf oge, %148, %177 : vector<64x128xf32>
    %cst_66 = arith.constant 0.000000e+00 : f32
    %179 = vector.broadcast %cst_66 : f32 to vector<64x128xf32>
    %180 = arith.subf %179, %176 : vector<64x128xf32>
    %181 = arith.select %178, %176, %180 : vector<64x128xi1>, vector<64x128xf32>
    %cst_67 = arith.constant 1.000000e+00 : f32
    %182 = vector.broadcast %cst_67 : f32 to vector<64x128xf32>
    %183 = arith.addf %182, %181 : vector<64x128xf32>
    %184 = arith.mulf %146, %183 : vector<64x128xf32>
    %cst_68 = arith.constant dense<0.000000e+00> : vector<64x16xf32>
    %185 = tpu.matmul %184, %82, %cst_68 {dimension_numbers = #tpu.dot_dimension_numbers<[1], [0], [0], [1], [0, 0, 1, 1], [], []>} : vector<64x128xf32>, vector<128x16xf32>, vector<64x16xf32> -> vector<64x16xf32>
    %186 = vector.broadcast %83 : vector<1x16xf32> to vector<64x16xf32>
    %187 = arith.addf %185, %186 : vector<64x16xf32>
    %c0_69 = arith.constant 0 : index
    %c0_70 = arith.constant 0 : index
    %188 = vector.load %arg8[%c0_69, %c0_70] : memref<64x16xf32, #tpu.memory_space<vmem>>, vector<64x16xf32>
    tpu.vector_store %arg8[%c0_69, %c0_70], %187 {strides = array<i32>} : memref<64x16xf32, #tpu.memory_space<vmem>>, vector<64x16xf32>,
    return
  }
  func.func @transform_0(%arg0: i32) -> (i32, i32) {
    %c0_i32 = arith.constant 0 : i32
    %c0_i32_0 = arith.constant 0 : i32
    return %arg0, %c0_i32 : i32, i32
  }
  func.func @transform_1(%arg0: i32) -> (i32, i32) {
    %c0_i32 = arith.constant 0 : i32
    %c0_i32_0 = arith.constant 0 : i32
    %c0_i32_1 = arith.constant 0 : i32
    return %c0_i32, %c0_i32_0 : i32, i32
  }
  func.func @transform_2(%arg0: i32) -> (i32, i32) {
    %c0_i32 = arith.constant 0 : i32
    %c0_i32_0 = arith.constant 0 : i32
    %c0_i32_1 = arith.constant 0 : i32
    return %c0_i32, %c0_i32_0 : i32, i32
  }
  func.func @transform_3(%arg0: i32) -> (i32, i32) {
    %c0_i32 = arith.constant 0 : i32
    %c0_i32_0 = arith.constant 0 : i32
    %c0_i32_1 = arith.constant 0 : i32
    return %c0_i32, %c0_i32_0 : i32, i32
  }
  func.func @transform_4(%arg0: i32) -> (i32, i32) {
    %c0_i32 = arith.constant 0 : i32
    %c0_i32_0 = arith.constant 0 : i32
    %c0_i32_1 = arith.constant 0 : i32
    return %c0_i32, %c0_i32_0 : i32, i32
  }
  func.func @transform_5(%arg0: i32) -> (i32, i32) {
    %c0_i32 = arith.constant 0 : i32
    %c0_i32_0 = arith.constant 0 : i32
    %c0_i32_1 = arith.constant 0 : i32
    return %c0_i32, %c0_i32_0 : i32, i32
  }
  func.func @transform_6(%arg0: i32) -> (i32, i32) {
    %c0_i32 = arith.constant 0 : i32
    %c0_i32_0 = arith.constant 0 : i32
    %c0_i32_1 = arith.constant 0 : i32
    return %c0_i32, %c0_i32_0 : i32, i32
  }
  func.func @transform_7(%arg0: i32) -> (i32, i32) {
    %c0_i32 = arith.constant 0 : i32
    %c0_i32_0 = arith.constant 0 : i32
    return %arg0, %c0_i32 : i32, i32
  }
}

</mosaic_0001>

<llo_original>
// kernel: tpu_custom_call.1
$region0: #{tpu_custom_call.1}
  #allocation0 [shape = 'u32[]', space=smem, size = 0x4, offset = 0x4, fixed_abs, tag = 'smem constant byte address 0x4 - core index']
  #allocation1 [shape = 'u32[144,128]{1,0:T(1,128)}', space=vmem, size = 0x12000, scoped, tag = 'internal scratch']
  %s0 = inlined_call_operand.hbm [shape: f32[64,128], index: 0, kind: input, shape index: {}]
  %s1 = inlined_call_operand.hbm [shape: f32[64,128], index: 1, kind: output, shape index: {}]
  %s2 = sld [smem:[#allocation0]]
  $region18: #{tpu_custom_call.1} parent=0
    _
  %s4 = ssub.s32 1, %s2
  %s5 = scalar_select 0, %s4, %s2
  $region1: #{tpu_custom_call.1} parent=0
    #allocation2 [shape = 'u8[32768]{0}', space=vmem, size = 0x8000, scoped, tag = 'input window, operand 0, single buffered']
    #allocation3 [shape = 's32[1]{0}', space=sflag, size = 0x4, scoped, tag = 'scoped memory for tpu_custom_call.1']
    #allocation4 [shape = 's32[1]{0}', space=sflag, size = 0x4, scoped, tag = 'scoped memory for tpu_custom_call.1']
    #allocation5 [shape = 'u8[32768]{0}', space=vmem, size = 0x8000, scoped, tag = 'output window, operand 0, single buffered']
    %6 = vsyncpa [#allocation3], 0
    %7 = vsyncpa [#allocation4], 0
    // Predicated region
    $region2: #{tpu_custom_call.1} parent=1 // pred_check
      _
    $region3: #{tpu_custom_call.1} parent=1 // pred_check_branch
      %9 = sbr.rel (0) target = $region5
    $region4: #{tpu_custom_call.1} parent=1 // pred_region
      %s11 = ssub.s32 1024, 1024
      %12 = vsyncadd [#allocation3], %s11
      %s13 = sshll.u32 [#allocation2], 4
      %s14 = int_to_ptr.vmem [resolvable:$true] %s13
      %19 = dma.hbm_to_vmem [thread:$0]  %s0, 1024, %s14, [#allocation3], 128, 128, 8
    $region5: #{tpu_custom_call.1} parent=1 // pred_fallthru
      _
    // Predicated region
    $region6: #{tpu_custom_call.1} parent=1 // pred_check
      _
    $region7: #{tpu_custom_call.1} parent=1 // pred_check_branch
      %21 = sbr.rel (0) target = $region9
    $region8: #{tpu_custom_call.1} parent=1 // pred_region
      %22 = dma.done [#allocation3], 1024
    $region9: #{tpu_custom_call.1} parent=1 // pred_fallthru
      _
    %v23 = vld [vmem:[#allocation2] sm:$0xff]
    %v24 = vld [vmem:[#allocation2 + $0x8] sm:$0xff]
    %v25 = vld [vmem:[#allocation2 + $0x10] sm:$0xff]
    %v26 = vld [vmem:[#allocation2 + $0x18] sm:$0xff]
    %v27 = vld [vmem:[#allocation2 + $0x20] sm:$0xff]
    %v28 = vld [vmem:[#allocation2 + $0x28] sm:$0xff]
    %v29 = vld [vmem:[#allocation2 + $0x30] sm:$0xff]
    %v30 = vld [vmem:[#allocation2 + $0x38] sm:$0xff]
    %v31 = vrot.slane %v23, 7
    %v32 = vrot.slane %v24, 7
    %v33 = vrot.slane %v25, 7
    %v34 = vrot.slane %v26, 7
    %v35 = vrot.slane %v27, 7
    %v36 = vrot.slane %v28, 7
    %v37 = vrot.slane %v29, 7
    %v38 = vrot.slane %v30, 7
    %v39 = vlaneseq
    %v40 = vshrl.u32 %v39, 7
    %vm41 = vcmp.lt.s32.totalorder %v40, 1
    %v42 = vsel %vm41, %v37, %v38
    %v43 = vsel %vm41, %v36, %v37
    %v44 = vsel %vm41, %v35, %v36
    %v45 = vsel %vm41, %v34, %v35
    %v46 = vsel %vm41, %v33, %v34
    %v47 = vsel %vm41, %v32, %v33
    %v48 = vsel %vm41, %v31, %v32
    %v49 = vsel %vm41, %v38, %v31
    %50 = vst [vmem:[#allocation5] sm:$0xff] %v49
    %51 = vst [vmem:[#allocation5 + $0x8] sm:$0xff] %v48
    %52 = vst [vmem:[#allocation5 + $0x10] sm:$0xff] %v47
    %53 = vst [vmem:[#allocation5 + $0x18] sm:$0xff] %v46
    %54 = vst [vmem:[#allocation5 + $0x20] sm:$0xff] %v45
    %55 = vst [vmem:[#allocation5 + $0x28] sm:$0xff] %v44
    %56 = vst [vmem:[#allocation5 + $0x30] sm:$0xff] %v43
    %57 = vst [vmem:[#allocation5 + $0x38] sm:$0xff] %v42
    // Predicated region
    $region10: #{tpu_custom_call.1} parent=1 // pred_check
      _
    $region11: #{tpu_custom_call.1} parent=1 // pred_check_branch
      %59 = sbr.rel (0) target = $region13
    $region12: #{tpu_custom_call.1} parent=1 // pred_region
      %s61 = ssub.s32 1024, 1024
      %62 = vsyncadd [#allocation4], %s61
      %s63 = sshll.u32 [#allocation5], 4
      %s64 = int_to_ptr.vmem [resolvable:$true] %s63
      %69 = dma.vmem_to_hbm [thread:$0]  %s64, 1024, %s1, [#allocation4], 128, 128, 8
    $region13: #{tpu_custom_call.1} parent=1 // pred_fallthru
      _
    // Predicated region
    $region14: #{tpu_custom_call.1} parent=1 // pred_check
      _
    $region15: #{tpu_custom_call.1} parent=1 // pred_check_branch
      %71 = sbr.rel (0) target = $region17
    $region16: #{tpu_custom_call.1} parent=1 // pred_region
      %72 = dma.done [#allocation4], 1024
    $region17: #{tpu_custom_call.1} parent=1 // pred_fallthru
      _
    %73 = vsyncpa [#allocation3], 1
    %74 = vsyncpa [#allocation4], 1

// kernel: tpu_custom_call.1
$region0: #{tpu_custom_call.1}
  #allocation0 [shape = 'u32[]', space=smem, size = 0x4, offset = 0x4, fixed_abs, tag = 'smem constant byte address 0x4 - core index']
  #allocation1 [shape = 'u32[144,128]{1,0:T(1,128)}', space=vmem, size = 0x12000, scoped, tag = 'internal scratch']
  #allocation2 [shape = 'f32[96,128]{1,0:T(8,128)}', space=vmem, size = 0xc000, scoped, tag = 'scratch operand']
  %s0 = inlined_call_operand.vmem [shape: f32[128,16], index: 0, kind: input, shape index: {}]
  %s1 = inlined_call_operand.vmem [shape: f32[16,128], index: 1, kind: input, shape index: {}]
  %s2 = inlined_call_operand.vmem [shape: f32[1,128], index: 2, kind: input, shape index: {}]
  %s3 = inlined_call_operand.vmem [shape: f32[9,128], index: 3, kind: input, shape index: {}]
  %s4 = inlined_call_operand.vmem [shape: f32[1,128], index: 4, kind: input, shape index: {}]
  %s5 = inlined_call_operand.vmem [shape: f32[128,16], index: 5, kind: input, shape index: {}]
  %s6 = inlined_call_operand.vmem [shape: f32[1,16], index: 6, kind: input, shape index: {}]
  %s7 = inlined_call_operand.vmem [shape: f32[128,16], index: 7, kind: output, shape index: {}]
  %s8 = sld [smem:[#allocation0]]
  $region61: #{tpu_custom_call.1} parent=0
    _
  %s10 = ssub.s32 1, %s8
  %s11 = scalar_select 0, %s10, %s8
  loop: start=0, step=1, limit=4
  $region2: #{tpu_custom_call.1} parent=0 // loop_pre_header
    _
  $region3: #{tpu_custom_call.1} parent=0 // loop_header
    %s13 = sphi 0, %s17
    %p14 = scmp.ge.s32.totalorder %s13, 4
    %s23 = sphi 0, %s25
    %s26 = sphi 0, %s23
    %s27 = sphi 0, %s26
    %s43 = sphi 0, %s27
    %s47 = sphi 0, %s47
    %s49 = sphi 0, %s47
    %s50 = sphi 0, %s49
    %s64 = sphi 0, %s50
    %s68 = sphi 0, %s68
    %s70 = sphi 0, %s68
    %s71 = sphi 0, %s70
    %s85 = sphi 0, %s71
    %s89 = sphi 0, %s89
    %s91 = sphi 0, %s89
    %s92 = sphi 0, %s91
    %s106 = sphi 0, %s92
    %s110 = sphi 0, %s110
    %s112 = sphi 0, %s110
    %s113 = sphi 0, %s112
    %s127 = sphi 0, %s113
    %s131 = sphi 0, %s131
    %s133 = sphi 0, %s131
    %s134 = sphi 0, %s133
    %s148 = sphi 0, %s134
    %s152 = sphi 0, %s152
    %s154 = sphi 0, %s152
    %s155 = sphi 0, %s154
    %s169 = sphi 0, %s155
    %s175 = sphi 0, %s177
    %s178 = sphi 0, %s175
    %s179 = sphi 0, %s178
    %s195 = sphi 0, %s179
  $region4: #{tpu_custom_call.1} parent=0 // loop_header_branch
    %16 = sbr.rel (%p14) target = $region8
  $region5: #{tpu_custom_call.1} parent=0 // loop_body
    %s18 = ssub.s32 %s13, 1
    %s19 = ssub.s32 %s13, 2
    %s20 = sadd.s32 %s13, 1
    %s21 = ssub.s32 %s13, %s20
    %p22 = scmp.eq.s32.totalorder %s21, 0
    %s24 = sadd.s32 %s23, 1
    %s25 = scalar_select %p22, %s23, %s24
    %p28 = pneg %p22
    %p29 = scmp.eq.s32.totalorder %s13, 1
    %p30 = por %p28, %p29
    %p31 = scmp.ne.s32.totalorder %s23, %s26
    %p32 = scmp.eq.s32.totalorder %s13, 0
    %p33 = por %p31, %p32
    %p34 = scmp.ne.s32.totalorder %s23, %s26
    %p35 = scmp.eq.s32.totalorder %s18, 1
    %p36 = por %p34, %p35
    %p37 = scmp.ne.s32.totalorder %s26, %s27
    %p38 = scmp.eq.s32.totalorder %s18, 0
    %p39 = por %p37, %p38
    %p40 = scmp.ne.s32.totalorder %s26, %s27
    %p41 = scmp.eq.s32.totalorder %s19, 1
    %p42 = por %p40, %p41
    %p44 = scmp.ne.s32.totalorder %s27, %s43
    %p45 = scmp.eq.s32.totalorder %s19, 0
    %p46 = por %p44, %p45
    %s48 = sadd.s32 %s47, 1
    %p51 = scmp.eq.s32.totalorder %s13, 1
    %p52 = scmp.ne.s32.totalorder %s47, %s49
    %p53 = scmp.eq.s32.totalorder %s13, 0
    %p54 = por %p52, %p53
    %p55 = scmp.ne.s32.totalorder %s47, %s49
    %p56 = scmp.eq.s32.totalorder %s18, 1
    %p57 = por %p55, %p56
    %p58 = scmp.ne.s32.totalorder %s49, %s50
    %p59 = scmp.eq.s32.totalorder %s18, 0
    %p60 = por %p58, %p59
    %p61 = scmp.ne.s32.totalorder %s49, %s50
    %p62 = scmp.eq.s32.totalorder %s19, 1
    %p63 = por %p61, %p62
    %p65 = scmp.ne.s32.totalorder %s50, %s64
    %p66 = scmp.eq.s32.totalorder %s19, 0
    %p67 = por %p65, %p66
    %s69 = sadd.s32 %s68, 1
    %p72 = scmp.eq.s32.totalorder %s13, 1
    %p73 = scmp.ne.s32.totalorder %s68, %s70
    %p74 = scmp.eq.s32.totalorder %s13, 0
    %p75 = por %p73, %p74
    %p76 = scmp.ne.s32.totalorder %s68, %s70
    %p77 = scmp.eq.s32.totalorder %s18, 1
    %p78 = por %p76, %p77
    %p79 = scmp.ne.s32.totalorder %s70, %s71
    %p80 = scmp.eq.s32.totalorder %s18, 0
    %p81 = por %p79, %p80
    %p82 = scmp.ne.s32.totalorder %s70, %s71
    %p83 = scmp.eq.s32.totalorder %s19, 1
    %p84 = por %p82, %p83
    %p86 = scmp.ne.s32.totalorder %s71, %s85
    %p87 = scmp.eq.s32.totalorder %s19, 0
    %p88 = por %p86, %p87
    %s90 = sadd.s32 %s89, 1
    %p93 = scmp.eq.s32.totalorder %s13, 1
    %p94 = scmp.ne.s32.totalorder %s89, %s91
    %p95 = scmp.eq.s32.totalorder %s13, 0
    %p96 = por %p94, %p95
    %p97 = scmp.ne.s32.totalorder %s89, %s91
    %p98 = scmp.eq.s32.totalorder %s18, 1
    %p99 = por %p97, %p98
    %p100 = scmp.ne.s32.totalorder %s91, %s92
    %p101 = scmp.eq.s32.totalorder %s18, 0
    %p102 = por %p100, %p101
    %p103 = scmp.ne.s32.totalorder %s91, %s92
    %p104 = scmp.eq.s32.totalorder %s19, 1
    %p105 = por %p103, %p104
    %p107 = scmp.ne.s32.totalorder %s92, %s106
    %p108 = scmp.eq.s32.totalorder %s19, 0
    %p109 = por %p107, %p108
    %s111 = sadd.s32 %s110, 1
    %p114 = scmp.eq.s32.totalorder %s13, 1
    %p115 = scmp.ne.s32.totalorder %s110, %s112
    %p116 = scmp.eq.s32.totalorder %s13, 0
    %p117 = por %p115, %p116
    %p118 = scmp.ne.s32.totalorder %s110, %s112
    %p119 = scmp.eq.s32.totalorder %s18, 1
    %p120 = por %p118, %p119
    %p121 = scmp.ne.s32.totalorder %s112, %s113
    %p122 = scmp.eq.s32.totalorder %s18, 0
    %p123 = por %p121, %p122
    %p124 = scmp.ne.s32.totalorder %s112, %s113
    %p125 = scmp.eq.s32.totalorder %s19, 1
    %p126 = por %p124, %p125
    %p128 = scmp.ne.s32.totalorder %s113, %s127
    %p129 = scmp.eq.s32.totalorder %s19, 0
    %p130 = por %p128, %p129
    %s132 = sadd.s32 %s131, 1
    %p135 = scmp.eq.s32.totalorder %s13, 1
    %p136 = scmp.ne.s32.totalorder %s131, %s133
    %p137 = scmp.eq.s32.totalorder %s13, 0
    %p138 = por %p136, %p137
    %p139 = scmp.ne.s32.totalorder %s131, %s133
    %p140 = scmp.eq.s32.totalorder %s18, 1
    %p141 = por %p139, %p140
    %p142 = scmp.ne.s32.totalorder %s133, %s134
    %p143 = scmp.eq.s32.totalorder %s18, 0
    %p144 = por %p142, %p143
    %p145 = scmp.ne.s32.totalorder %s133, %s134
    %p146 = scmp.eq.s32.totalorder %s19, 1
    %p147 = por %p145, %p146
    %p149 = scmp.ne.s32.totalorder %s134, %s148
    %p150 = scmp.eq.s32.totalorder %s19, 0
    %p151 = por %p149, %p150
    %s153 = sadd.s32 %s152, 1
    %p156 = scmp.eq.s32.totalorder %s13, 1
    %p157 = scmp.ne.s32.totalorder %s152, %s154
    %p158 = scmp.eq.s32.totalorder %s13, 0
    %p159 = por %p157, %p158
    %p160 = scmp.ne.s32.totalorder %s152, %s154
    %p161 = scmp.eq.s32.totalorder %s18, 1
    %p162 = por %p160, %p161
    %p163 = scmp.ne.s32.totalorder %s154, %s155
    %p164 = scmp.eq.s32.totalorder %s18, 0
    %p165 = por %p163, %p164
    %p166 = scmp.ne.s32.totalorder %s154, %s155
    %p167 = scmp.eq.s32.totalorder %s19, 1
    %p168 = por %p166, %p167
    %p170 = scmp.ne.s32.totalorder %s155, %s169
    %p171 = scmp.eq.s32.totalorder %s19, 0
    %p172 = por %p170, %p171
    %s173 = ssub.s32 %s13, %s20
    %p174 = scmp.eq.s32.totalorder %s173, 0
    %s176 = sadd.s32 %s175, 1
    %s177 = scalar_select %p174, %s175, %s176
    %p180 = pneg %p174
    %p181 = scmp.eq.s32.totalorder %s13, 1
    %p182 = por %p180, %p181
    %p183 = scmp.ne.s32.totalorder %s175, %s178
    %p184 = scmp.eq.s32.totalorder %s13, 0
    %p185 = por %p183, %p184
    %p186 = scmp.ne.s32.totalorder %s175, %s178
    %p187 = scmp.eq.s32.totalorder %s18, 1
    %p188 = por %p186, %p187
    %p189 = scmp.ne.s32.totalorder %s178, %s179
    %p190 = scmp.eq.s32.totalorder %s18, 0
    %p191 = por %p189, %p190
    %p192 = scmp.ne.s32.totalorder %s178, %s179
    %p193 = scmp.eq.s32.totalorder %s19, 1
    %p194 = por %p192, %p193
    %p196 = scmp.ne.s32.totalorder %s179, %s195
    %p197 = scmp.eq.s32.totalorder %s19, 0
    %p198 = por %p196, %p197
    %p199 = scmp.le.s32.totalorder 1, %s13
    %p200 = scmp.lt.s32.totalorder %s13, 3
    %p201 = pnand %p199, %p200
    %p202 = pneg %p201
    // Predicated region
    $region9: #{tpu_custom_call.1} parent=5 // pred_check
      _
    $region10: #{tpu_custom_call.1} parent=5 // pred_check_branch
      %204 = sbr.rel (%p201) target = $region12
    $region11: #{tpu_custom_call.1} parent=5 // pred_region
      %s205 = ssub.s32 %s13, 1
      // Predicated region
      $region13: #{tpu_custom_call.1} parent=11 // pred_check
        %p206 = pneg %p60
      $region14: #{tpu_custom_call.1} parent=11 // pred_check_branch
        %208 = sbr.rel (%p206) target = $region16
      $region15: #{tpu_custom_call.1} parent=11 // pred_region
        _
      $region16: #{tpu_custom_call.1} parent=11 // pred_fallthru
        _
      // Predicated region
      $region17: #{tpu_custom_call.1} parent=11 // pred_check
        %p209 = pneg %p81
      $region18: #{tpu_custom_call.1} parent=11 // pred_check_branch
        %211 = sbr.rel (%p209) target = $region20
      $region19: #{tpu_custom_call.1} parent=11 // pred_region
        _
      $region20: #{tpu_custom_call.1} parent=11 // pred_fallthru
        _
      // Predicated region
      $region21: #{tpu_custom_call.1} parent=11 // pred_check
        %p212 = pneg %p102
      $region22: #{tpu_custom_call.1} parent=11 // pred_check_branch
        %214 = sbr.rel (%p212) target = $region24
      $region23: #{tpu_custom_call.1} parent=11 // pred_region
        _
      $region24: #{tpu_custom_call.1} parent=11 // pred_fallthru
        _
      // Predicated region
      $region25: #{tpu_custom_call.1} parent=11 // pred_check
        %p215 = pneg %p123
      $region26: #{tpu_custom_call.1} parent=11 // pred_check_branch
        %217 = sbr.rel (%p215) target = $region28
      $region27: #{tpu_custom_call.1} parent=11 // pred_region
        _
      $region28: #{tpu_custom_call.1} parent=11 // pred_fallthru
        _
      // Predicated region
      $region29: #{tpu_custom_call.1} parent=11 // pred_check
        %p218 = pneg %p144
      $region30: #{tpu_custom_call.1} parent=11 // pred_check_branch
        %220 = sbr.rel (%p218) target = $region32
      $region31: #{tpu_custom_call.1} parent=11 // pred_region
        _
      $region32: #{tpu_custom_call.1} parent=11 // pred_fallthru
        _
      // Predicated region
      $region33: #{tpu_custom_call.1} parent=11 // pred_check
        %p221 = pneg %p165
      $region34: #{tpu_custom_call.1} parent=11 // pred_check_branch
        %223 = sbr.rel (%p221) target = $region36
      $region35: #{tpu_custom_call.1} parent=11 // pred_region
        _
      $region36: #{tpu_custom_call.1} parent=11 // pred_fallthru
        _
    $region12: #{tpu_custom_call.1} parent=5 // pred_fallthru
      _
    %p224 = scmp.lt.s32.totalorder %s13, 2
    // Predicated region
    $region37: #{tpu_custom_call.1} parent=5 // pred_check
      %p225 = pneg %p224
    $region38: #{tpu_custom_call.1} parent=5 // pred_check_branch
      %227 = sbr.rel (%p225) target = $region40
    $region39: #{tpu_custom_call.1} parent=5 // pred_region
      // Predicated region
      $region41: #{tpu_custom_call.1} parent=39 // pred_check
        %p228 = pneg %p33
      $region42: #{tpu_custom_call.1} parent=39 // pred_check_branch
        %230 = sbr.rel (%p228) target = $region44
      $region43: #{tpu_custom_call.1} parent=39 // pred_region
        %s231 = smul.u32 8, %s13
        %p232 = scmp.lt.s32.totalorder %s231, 15
        %s233 = scalar_select %p232, %s231, 15
        %s234 = smul.addr %s233, 8
        %s235 = scalar_lea.vmem %s0, %s234
        %s236 = smul.u32 8, %s13
      $region44: #{tpu_custom_call.1} parent=39 // pred_fallthru
        _
    $region40: #{tpu_custom_call.1} parent=5 // pred_fallthru
      _
    %p237 = scmp.le.s32.totalorder 1, %s13
    %p238 = scmp.lt.s32.totalorder %s13, 3
    %p239 = pnand %p237, %p238
    %p240 = pneg %p239
    // Predicated region
    $region45: #{tpu_custom_call.1} parent=5 // pred_check
      _
    $region46: #{tpu_custom_call.1} parent=5 // pred_check_branch
      %242 = sbr.rel (%p239) target = $region48
    $region47: #{tpu_custom_call.1} parent=5 // pred_region
      %s243 = ssub.s32 %s13, 1
      %s244 = smul.u32 8, %s18
      %p245 = scmp.lt.s32.totalorder %s244, 15
      %s246 = scalar_select %p245, %s244, 15
      %s247 = smul.addr %s246, 8
      %s248 = scalar_lea.vmem %s0, %s247
      %p249 = pneg %p39
      %p250 = pneg %p36
      %p251 = pneg %p60
      %p252 = pneg %p57
      %p253 = pneg %p81
      %p254 = pneg %p78
      %p255 = pneg %p102
      %p256 = pneg %p99
      %p257 = pneg %p123
      %p258 = pneg %p120
      %p259 = pneg %p144
      %p260 = pneg %p141
      %p261 = pneg %p165
      %p262 = pneg %p162
      %p263 = pneg %p191
      %p264 = pneg %p188
      %s265 = smul.u32 8, %s18
      %p266 = scmp.lt.s32.totalorder %s265, 15
      %s267 = scalar_select %p266, %s265, 15
      %s268 = smul.addr %s267, 8
      %s269 = scalar_lea.vmem %s7, %s268
      %s270 = smul.u32 8, %s18
      %p271 = scmp.lt.s32.totalorder %s270, 15
      %s272 = scalar_select %p271, %s270, 15
      %s273 = smul.addr %s272, 8
      %s274 = scalar_lea.vmem %s0, %s273
      %s275 = smul.u32 8, %s18
      %s276 = smul.u32 8, %s18
      %p277 = scmp.lt.s32.totalorder %s276, 15
      %s278 = scalar_select %p277, %s276, 15
      %s279 = smul.addr %s278, 8
      %s280 = scalar_lea.vmem %s7, %s279
      %s281 = smul.u32 8, %s18
      %v282 = vld [vmem:[%s274] sm:$0xff]
      %v283 = vld [vmem:[%s274 + $0x8] sm:$0xff]
      %v284 = vld [vmem:[%s274 + $0x10] sm:$0xff]
      %v285 = vld [vmem:[%s274 + $0x18] sm:$0xff]
      %v286 = vld [vmem:[%s274 + $0x20] sm:$0xff]
      %v287 = vld [vmem:[%s274 + $0x28] sm:$0xff]
      %v288 = vld [vmem:[%s274 + $0x30] sm:$0xff]
      %v289 = vld [vmem:[%s274 + $0x38] sm:$0xff]
      %v290 = vld [vmem:[%s1] sm:$0xff]
      %v291 = vld [vmem:[%s1 + $0x8] sm:$0xff]
      %v292 = vld [vmem:[%s2] sm:$0x1]
      %v294 = vlaneseq
      %v295 = vshrl.u32 %v294, 7
      %v296 = vsub.s32 0, %v295
      %v297 = vrot.slane %v292, %v296
      %vm299 = vcmask 130048
      %v301 = vsel %vm299, %v282, 0
      %v304 = vsel %vm299, %v283, 0
      %v307 = vsel %vm299, %v284, 0
      %v310 = vsel %vm299, %v285, 0
      %v313 = vsel %vm299, %v286, 0
      %v316 = vsel %vm299, %v287, 0
      %v319 = vsel %vm299, %v288, 0
      %v322 = vsel %vm299, %v289, 0
      %324 = vmatprep.subr.mxu0 0.0
      %325 = vmatpush1.msra.mxu0 %v290
      %326 = vmatprep.subr.mxu0 0.0
      %327 = vmatpush1.msra.mxu0 %v291
      %328 = vmatprep.subr.mxu0 0.0
      %329 = vmatpush1.msra.mxu0 0.0
      %330 = vmatprep.subr.mxu0 0.0
      %331 = vmatpush1.msra.mxu0 0.0
      %332 = vmatprep.subr.mxu0 0.0
      %333 = vmatpush1.msra.mxu0 0.0
      %334 = vmatprep.subr.mxu0 0.0
      %335 = vmatpush1.msra.mxu0 0.0
      %336 = vmatprep.subr.mxu0 0.0
      %337 = vmatpush1.msra.mxu0 0.0
      %338 = vmatprep.subr.mxu0 0.0
      %339 = vmatpush1.msra.mxu0 0.0
      %340 = vmatprep.subr.mxu0 0.0
      %341 = vmatpush1.msra.mxu0 0.0
      %342 = vmatprep.subr.mxu0 0.0
      %343 = vmatpush1.msra.mxu0 0.0
      %344 = vmatprep.subr.mxu0 0.0
      %345 = vmatpush1.msra.mxu0 0.0
      %346 = vmatprep.subr.mxu0 0.0
      %347 = vmatpush1.msra.mxu0 0.0
      %348 = vmatprep.subr.mxu0 0.0
      %349 = vmatpush1.msra.mxu0 0.0
      %350 = vmatprep.subr.mxu0 0.0
      %351 = vmatpush1.msra.mxu0 0.0
      %352 = vmatprep.subr.mxu0 0.0
      %353 = vmatpush1.msra.mxu0 0.0
      %354 = vmatprep.subr.mxu0 0.0
      %355 = vmatpush1.msra.mxu0 0.0
      %356 = vmatprep.subr.mxu0 0.0
      %357 = vmatpush1.msra.mxu0 0.0
      %358 = vmatprep.subr.mxu0 0.0
      %359 = vmatpush1.msra.mxu0 0.0
      %360 = vmatprep.subr.mxu0 0.0
      %361 = vmatpush1.msra.mxu0 0.0
      %362 = vmatprep.subr.mxu0 0.0
      %363 = vmatpush1.msra.mxu0 0.0
      %364 = vmatprep.subr.mxu0 0.0
      %365 = vmatpush1.msra.mxu0 0.0
      %366 = vmatprep.subr.mxu0 0.0
      %367 = vmatpush1.msra.mxu0 0.0
      %368 = vmatprep.subr.mxu0 0.0
      %369 = vmatpush1.msra.mxu0 0.0
      %370 = vmatprep.subr.mxu0 0.0
      %371 = vmatpush1.msra.mxu0 0.0
      %372 = vmatprep.subr.mxu0 0.0
      %373 = vmatpush1.msra.mxu0 0.0
      %374 = vmatprep.subr.mxu0 0.0
      %375 = vmatpush1.msra.mxu0 0.0
      %376 = vmatprep.subr.mxu0 0.0
      %377 = vmatpush1.msra.mxu0 0.0
      %378 = vmatprep.subr.mxu0 0.0
      %379 = vmatpush1.msra.mxu0 0.0
      %380 = vmatprep.subr.mxu0 0.0
      %381 = vmatpush1.msra.mxu0 0.0
      %382 = vmatprep.subr.mxu0 0.0
      %383 = vmatpush1.msra.mxu0 0.0
      %384 = vmatprep.subr.mxu0 0.0
      %385 = vmatpush1.msra.mxu0 0.0
      %386 = vmatprep.subr.mxu0 0.0
      %387 = vmatpush1.msra.mxu0 0.0
      %388 = vmatprep.mubr.f32.mxu0 0.0
      %389 = vmatmul.mubr.f32.gmra.mrb[0].mxu0 %v301
      %v390 = vpop.f32.mrb[0].mxu0
      %v391 = vadd.f32 %v297, %v390
      %v392 = vpop.f32.mrb[0].mxu0
      %393 = vmatprep.mubr.f32.mxu0 0.0
      %394 = vmatmul.mubr.f32.gmra.mrb[0].mxu0 %v304
      %v395 = vpop.f32.mrb[0].mxu0
      %v396 = vadd.f32 %v297, %v395
      %v397 = vpop.f32.mrb[0].mxu0
      %398 = vmatprep.mubr.f32.mxu0 0.0
      %399 = vmatmul.mubr.f32.gmra.mrb[0].mxu0 %v307
      %v400 = vpop.f32.mrb[0].mxu0
      %v401 = vadd.f32 %v297, %v400
      %v402 = vpop.f32.mrb[0].mxu0
      %403 = vmatprep.mubr.f32.mxu0 0.0
      %404 = vmatmul.mubr.f32.gmra.mrb[0].mxu0 %v310
      %v405 = vpop.f32.mrb[0].mxu0
      %v406 = vadd.f32 %v297, %v405
      %v407 = vpop.f32.mrb[0].mxu0
      %408 = vmatprep.mubr.f32.mxu0 0.0
      %409 = vmatmul.mubr.f32.gmra.mrb[0].mxu0 %v313
      %v410 = vpop.f32.mrb[0].mxu0
      %v411 = vadd.f32 %v297, %v410
      %v412 = vpop.f32.mrb[0].mxu0
      %413 = vmatprep.mubr.f32.mxu0 0.0
      %414 = vmatmul.mubr.f32.gmra.mrb[0].mxu0 %v316
      %v415 = vpop.f32.mrb[0].mxu0
      %v416 = vadd.f32 %v297, %v415
      %v417 = vpop.f32.mrb[0].mxu0
      %418 = vmatprep.mubr.f32.mxu0 0.0
      %419 = vmatmul.mubr.f32.gmra.mrb[0].mxu0 %v319
      %v420 = vpop.f32.mrb[0].mxu0
      %v421 = vadd.f32 %v297, %v420
      %v422 = vpop.f32.mrb[0].mxu0
      %423 = vmatprep.mubr.f32.mxu0 0.0
      %424 = vmatmul.mubr.f32.gmra.mrb[0].mxu0 %v322
      %v425 = vpop.f32.mrb[0].mxu0
      %v426 = vadd.f32 %v297, %v425
      %v427 = vpop.f32.mrb[0].mxu0
      %428 = vdwg.mxu0
      %v429 = vmul.f32 %v391, 0.5
      %v430 = vmul.f32 %v396, 0.5
      %v431 = vmul.f32 %v401, 0.5
      %v432 = vmul.f32 %v406, 0.5
      %v433 = vmul.f32 %v411, 0.5
      %v434 = vmul.f32 %v416, 0.5
      %v435 = vmul.f32 %v421, 0.5
      %v436 = vmul.f32 %v426, 0.5
      %v437 = vmul.f32 %v391, 0.70710677
      %v438 = vmul.f32 %v396, 0.70710677
      %v439 = vmul.f32 %v401, 0.70710677
      %v440 = vmul.f32 %v406, 0.70710677
      %v441 = vmul.f32 %v411, 0.70710677
      %v442 = vmul.f32 %v416, 0.70710677
      %v443 = vmul.f32 %v421, 0.70710677
      %v444 = vmul.f32 %v426, 0.70710677
      %v445 = vand.u32 2147483647, %v437
      %v446 = vand.u32 2147483647, %v438
      %v447 = vand.u32 2147483647, %v439
      %v448 = vand.u32 2147483647, %v440
      %v449 = vand.u32 2147483647, %v441
      %v450 = vand.u32 2147483647, %v442
      %v451 = vand.u32 2147483647, %v443
      %v452 = vand.u32 2147483647, %v444
      %v453 = vmul.f32 %v445, 0.3275911
      %v454 = vmul.f32 %v446, 0.3275911
      %v455 = vmul.f32 %v447, 0.3275911
      %v456 = vmul.f32 %v448, 0.3275911
      %v457 = vmul.f32 %v449, 0.3275911
      %v458 = vmul.f32 %v450, 0.3275911
      %v459 = vmul.f32 %v451, 0.3275911
      %v460 = vmul.f32 %v452, 0.3275911
      %v461 = vadd.f32 %v453, 1.0
      %v462 = vadd.f32 %v454, 1.0
      %v463 = vadd.f32 %v455, 1.0
      %v464 = vadd.f32 %v456, 1.0
      %v465 = vadd.f32 %v457, 1.0
      %v466 = vadd.f32 %v458, 1.0
      %v467 = vadd.f32 %v459, 1.0
      %v468 = vadd.f32 %v460, 1.0
      %v469 = vrcp.pop %v461
      %v470 = vmul.f32 1.0, %v469
      %v471 = vrcp.pop %v462
      %v472 = vmul.f32 1.0, %v471
      %v473 = vrcp.pop %v463
      %v474 = vmul.f32 1.0, %v473
      %v475 = vrcp.pop %v464
      %v476 = vmul.f32 1.0, %v475
      %v477 = vrcp.pop %v465
      %v478 = vmul.f32 1.0, %v477
      %v479 = vrcp.pop %v466
      %v480 = vmul.f32 1.0, %v479
      %v481 = vrcp.pop %v467
      %v482 = vmul.f32 1.0, %v481
      %v483 = vrcp.pop %v468
      %v484 = vmul.f32 1.0, %v483
      %v485 = vmul.f32 %v470, 1.0614054
      %v486 = vmul.f32 %v472, 1.0614054
      %v487 = vmul.f32 %v474, 1.0614054
      %v488 = vmul.f32 %v476, 1.0614054
      %v489 = vmul.f32 %v478, 1.0614054
      %v490 = vmul.f32 %v480, 1.0614054
      %v491 = vmul.f32 %v482, 1.0614054
      %v492 = vmul.f32 %v484, 1.0614054
      %v493 = vadd.f32 %v485, -1.4531521
      %v494 = vadd.f32 %v486, -1.4531521
      %v495 = vadd.f32 %v487, -1.4531521
      %v496 = vadd.f32 %v488, -1.4531521
      %v497 = vadd.f32 %v489, -1.4531521
      %v498 = vadd.f32 %v490, -1.4531521
      %v499 = vadd.f32 %v491, -1.4531521
      %v500 = vadd.f32 %v492, -1.4531521
      %v501 = vmul.f32 %v493, %v470
      %v502 = vmul.f32 %v494, %v472
      %v503 = vmul.f32 %v495, %v474
      %v504 = vmul.f32 %v496, %v476
      %v505 = vmul.f32 %v497, %v478
      %v506 = vmul.f32 %v498, %v480
      %v507 = vmul.f32 %v499, %v482
      %v508 = vmul.f32 %v500, %v484
      %v509 = vadd.f32 %v501, 1.4214138
      %v510 = vadd.f32 %v502, 1.4214138
      %v511 = vadd.f32 %v503, 1.4214138
      %v512 = vadd.f32 %v504, 1.4214138
      %v513 = vadd.f32 %v505, 1.4214138
      %v514 = vadd.f32 %v506, 1.4214138
      %v515 = vadd.f32 %v507, 1.4214138
      %v516 = vadd.f32 %v508, 1.4214138
      %v517 = vmul.f32 %v509, %v470
      %v518 = vmul.f32 %v510, %v472
      %v519 = vmul.f32 %v511, %v474
      %v520 = vmul.f32 %v512, %v476
      %v521 = vmul.f32 %v513, %v478
      %v522 = vmul.f32 %v514, %v480
      %v523 = vmul.f32 %v515, %v482
      %v524 = vmul.f32 %v516, %v484
      %v525 = vadd.f32 %v517, -0.28449672
      %v526 = vadd.f32 %v518, -0.28449672
      %v527 = vadd.f32 %v519, -0.28449672
      %v528 = vadd.f32 %v520, -0.28449672
      %v529 = vadd.f32 %v521, -0.28449672
      %v530 = vadd.f32 %v522, -0.28449672
      %v531 = vadd.f32 %v523, -0.28449672
      %v532 = vadd.f32 %v524, -0.28449672
      %v533 = vmul.f32 %v525, %v470
      %v534 = vmul.f32 %v526, %v472
      %v535 = vmul.f32 %v527, %v474
      %v536 = vmul.f32 %v528, %v476
      %v537 = vmul.f32 %v529, %v478
      %v538 = vmul.f32 %v530, %v480
      %v539 = vmul.f32 %v531, %v482
      %v540 = vmul.f32 %v532, %v484
      %v541 = vadd.f32 %v533, 0.2548296
      %v542 = vadd.f32 %v534, 0.2548296
      %v543 = vadd.f32 %v535, 0.2548296
      %v544 = vadd.f32 %v536, 0.2548296
      %v545 = vadd.f32 %v537, 0.2548296
      %v546 = vadd.f32 %v538, 0.2548296
      %v547 = vadd.f32 %v539, 0.2548296
      %v548 = vadd.f32 %v540, 0.2548296
      %v549 = vmul.f32 %v541, %v470
      %v550 = vmul.f32 %v542, %v472
      %v551 = vmul.f32 %v543, %v474
      %v552 = vmul.f32 %v544, %v476
      %v553 = vmul.f32 %v545, %v478
      %v554 = vmul.f32 %v546, %v480
      %v555 = vmul.f32 %v547, %v482
      %v556 = vmul.f32 %v548, %v484
      %v557 = vsub.f32 0.0, %v445
      %v558 = vsub.f32 0.0, %v446
      %v559 = vsub.f32 0.0, %v447
      %v560 = vsub.f32 0.0, %v448
      %v561 = vsub.f32 0.0, %v449
      %v562 = vsub.f32 0.0, %v450
      %v563 = vsub.f32 0.0, %v451
      %v564 = vsub.f32 0.0, %v452
      %v565 = vmul.f32 %v557, %v445
      %v566 = vmul.f32 %v558, %v446
      %v567 = vmul.f32 %v559, %v447
      %v568 = vmul.f32 %v560, %v448
      %v569 = vmul.f32 %v561, %v449
      %v570 = vmul.f32 %v562, %v450
      %v571 = vmul.f32 %v563, %v451
      %v572 = vmul.f32 %v564, %v452
      %v573 = vmul.f32 %v565, 1.442695
      %v574 = vpow.pop %v573
      %v575 = vmul.f32 %v566, 1.442695
      %v576 = vpow.pop %v575
      %v577 = vmul.f32 %v567, 1.442695
      %v578 = vpow.pop %v577
      %v579 = vmul.f32 %v568, 1.442695
      %v580 = vpow.pop %v579
      %v581 = vmul.f32 %v569, 1.442695
      %v582 = vpow.pop %v581
      %v583 = vmul.f32 %v570, 1.442695
      %v584 = vpow.pop %v583
      %v585 = vmul.f32 %v571, 1.442695
      %v586 = vpow.pop %v585
      %v587 = vmul.f32 %v572, 1.442695
      %v588 = vpow.pop %v587
      %v589 = vmul.f32 %v549, %v574
      %v590 = vmul.f32 %v550, %v576
      %v591 = vmul.f32 %v551, %v578
      %v592 = vmul.f32 %v552, %v580
      %v593 = vmul.f32 %v553, %v582
      %v594 = vmul.f32 %v554, %v584
      %v595 = vmul.f32 %v555, %v586
      %v596 = vmul.f32 %v556, %v588
      %v597 = vsub.f32 1.0, %v589
      %v598 = vsub.f32 1.0, %v590
      %v599 = vsub.f32 1.0, %v591
      %v600 = vsub.f32 1.0, %v592
      %v601 = vsub.f32 1.0, %v593
      %v602 = vsub.f32 1.0, %v594
      %v603 = vsub.f32 1.0, %v595
      %v604 = vsub.f32 1.0, %v596
      %vm605 = vcmp.ge.f32.partialorder %v437, 0.0
      %vm606 = vcmp.ge.f32.partialorder %v438, 0.0
      %vm607 = vcmp.ge.f32.partialorder %v439, 0.0
      %vm608 = vcmp.ge.f32.partialorder %v440, 0.0
      %vm609 = vcmp.ge.f32.partialorder %v441, 0.0
      %vm610 = vcmp.ge.f32.partialorder %v442, 0.0
      %vm611 = vcmp.ge.f32.partialorder %v443, 0.0
      %vm612 = vcmp.ge.f32.partialorder %v444, 0.0
      %v613 = vsub.f32 0.0, %v597
      %v614 = vsub.f32 0.0, %v598
      %v615 = vsub.f32 0.0, %v599
      %v616 = vsub.f32 0.0, %v600
      %v617 = vsub.f32 0.0, %v601
      %v618 = vsub.f32 0.0, %v602
      %v619 = vsub.f32 0.0, %v603
      %v620 = vsub.f32 0.0, %v604
      %v621 = vsel %vm605, %v597, %v613
      %v622 = vsel %vm606, %v598, %v614
      %v623 = vsel %vm607, %v599, %v615
      %v624 = vsel %vm608, %v600, %v616
      %v625 = vsel %vm609, %v601, %v617
      %v626 = vsel %vm610, %v602, %v618
      %v627 = vsel %vm611, %v603, %v619
      %v628 = vsel %vm612, %v604, %v620
      %v629 = vadd.f32 %v621, 1.0
      %v630 = vadd.f32 %v622, 1.0
      %v631 = vadd.f32 %v623, 1.0
      %v632 = vadd.f32 %v624, 1.0
      %v633 = vadd.f32 %v625, 1.0
      %v634 = vadd.f32 %v626, 1.0
      %v635 = vadd.f32 %v627, 1.0
      %v636 = vadd.f32 %v628, 1.0
      %v637 = vmul.f32 %v429, %v629
      %v638 = vmul.f32 %v430, %v630
      %v639 = vmul.f32 %v431, %v631
      %v640 = vmul.f32 %v432, %v632
      %v641 = vmul.f32 %v433, %v633
      %v642 = vmul.f32 %v434, %v634
      %v643 = vmul.f32 %v435, %v635
      %v644 = vmul.f32 %v436, %v636
      %645 = vst [vmem:[#allocation2] sm:$0xff] 0.0
      %646 = vst [vmem:[#allocation2 + $0x8] sm:$0xff] 0.0
      %647 = vst [vmem:[#allocation2 + $0x50] sm:$0xff] 0.0
      %648 = vst [vmem:[#allocation2 + $0x58] sm:$0xff] 0.0
      %649 = vst [vmem:[#allocation2 + $0x10] sm:$0xff] %v637
      %650 = vst [vmem:[#allocation2 + $0x18] sm:$0xff] %v638
      %651 = vst [vmem:[#allocation2 + $0x20] sm:$0xff] %v639
      %652 = vst [vmem:[#allocation2 + $0x28] sm:$0xff] %v640
      %653 = vst [vmem:[#allocation2 + $0x30] sm:$0xff] %v641
      %654 = vst [vmem:[#allocation2 + $0x38] sm:$0xff] %v642
      %655 = vst [vmem:[#allocation2 + $0x40] sm:$0xff] %v643
      %656 = vst [vmem:[#allocation2 + $0x48] sm:$0xff] %v644
      %v657 = vlaneseq
      %v658 = vshrl.u32 %v657, 7
      %v659 = vadd.s32 %v658, 8
      %v660 = vadd.s32 %v658, 16
      %v661 = vadd.s32 %v658, 24
      %v662 = vadd.s32 %v658, 32
      %v663 = vadd.s32 %v658, 40
      %v664 = vadd.s32 %v658, 48
      %v665 = vadd.s32 %v658, 56
      %vm666 = vcmp.lt.s32.totalorder %v658, 0
      %v667 = vsub.s32 0, %v658
      %v668 = vsel %vm666, %v667, %v658
      %v669 = vshrl.u32 %v668, 3
      %v670 = vand.u32 %v668, 7
      %v671 = vsub.s32 0, %v670
      %v672 = vsel %vm666, %v671, %v670
      %vm673 = vcmp.lt.s32.totalorder %v659, 0
      %v674 = vsub.s32 0, %v659
      %v675 = vsel %vm673, %v674, %v659
      %v676 = vshrl.u32 %v675, 3
      %v677 = vand.u32 %v675, 7
      %v678 = vsub.s32 0, %v677
      %v679 = vsel %vm673, %v678, %v677
      %vm680 = vcmp.lt.s32.totalorder %v660, 0
      %v681 = vsub.s32 0, %v660
      %v682 = vsel %vm680, %v681, %v660
      %v683 = vshrl.u32 %v682, 3
      %v684 = vand.u32 %v682, 7
      %v685 = vsub.s32 0, %v684
      %v686 = vsel %vm680, %v685, %v684
      %vm687 = vcmp.lt.s32.totalorder %v661, 0
      %v688 = vsub.s32 0, %v661
      %v689 = vsel %vm687, %v688, %v661
      %v690 = vshrl.u32 %v689, 3
      %v691 = vand.u32 %v689, 7
      %v692 = vsub.s32 0, %v691
      %v693 = vsel %vm687, %v692, %v691
      %vm694 = vcmp.lt.s32.totalorder %v662, 0
      %v695 = vsub.s32 0, %v662
      %v696 = vsel %vm694, %v695, %v662
      %v697 = vshrl.u32 %v696, 3
      %v698 = vand.u32 %v696, 7
      %v699 = vsub.s32 0, %v698
      %v700 = vsel %vm694, %v699, %v698
      %vm701 = vcmp.lt.s32.totalorder %v663, 0
      %v702 = vsub.s32 0, %v663
      %v703 = vsel %vm701, %v702, %v663
      %v704 = vshrl.u32 %v703, 3
      %v705 = vand.u32 %v703, 7
      %v706 = vsub.s32 0, %v705
      %v707 = vsel %vm701, %v706, %v705
      %vm708 = vcmp.lt.s32.totalorder %v664, 0
      %v709 = vsub.s32 0, %v664
      %v710 = vsel %vm708, %v709, %v664
      %v711 = vshrl.u32 %v710, 3
      %v712 = vand.u32 %v710, 7
      %v713 = vsub.s32 0, %v712
      %v714 = vsel %vm708, %v713, %v712
      %vm715 = vcmp.lt.s32.totalorder %v665, 0
      %v716 = vsub.s32 0, %v665
      %v717 = vsel %vm715, %v716, %v665
      %v718 = vshrl.u32 %v717, 3
      %v719 = vand.u32 %v717, 7
      %v720 = vsub.s32 0, %v719
      %v721 = vsel %vm715, %v720, %v719
      %vm722 = vcmp.ne.s32.totalorder %v672, 0
      %vm723 = vcmp.ne.s32.totalorder %v679, 0
      %vm724 = vcmp.ne.s32.totalorder %v686, 0
      %vm725 = vcmp.ne.s32.totalorder %v693, 0
      %vm726 = vcmp.ne.s32.totalorder %v700, 0
      %vm727 = vcmp.ne.s32.totalorder %v707, 0
      %vm728 = vcmp.ne.s32.totalorder %v714, 0
      %vm729 = vcmp.ne.s32.totalorder %v721, 0
      %vm730 = vcmp.lt.s32.totalorder %v672, 0
      %vm731 = vcmp.lt.s32.totalorder %v679, 0
      %vm732 = vcmp.lt.s32.totalorder %v686, 0
      %vm733 = vcmp.lt.s32.totalorder %v693, 0
      %vm734 = vcmp.lt.s32.totalorder %v700, 0
      %vm735 = vcmp.lt.s32.totalorder %v707, 0
      %vm736 = vcmp.lt.s32.totalorder %v714, 0
      %vm737 = vcmp.lt.s32.totalorder %v721, 0
      %vm738 = vmand %vm730, %vm722
      %vm739 = vmand %vm731, %vm723
      %vm740 = vmand %vm732, %vm724
      %vm741 = vmand %vm733, %vm725
      %vm742 = vmand %vm734, %vm726
      %vm743 = vmand %vm735, %vm727
      %vm744 = vmand %vm736, %vm728
      %vm745 = vmand %vm737, %vm729
      %v746 = vadd.s32 %v672, 8
      %v747 = vadd.s32 %v679, 8
      %v748 = vadd.s32 %v686, 8
      %v749 = vadd.s32 %v693, 8
      %v750 = vadd.s32 %v700, 8
      %v751 = vadd.s32 %v707, 8
      %v752 = vadd.s32 %v714, 8
      %v753 = vadd.s32 %v721, 8
      %v754 = vsel %vm738, %v746, %v672
      %v755 = vsel %vm739, %v747, %v679
      %v756 = vsel %vm740, %v748, %v686
      %v757 = vsel %vm741, %v749, %v693
      %v758 = vsel %vm742, %v750, %v700
      %v759 = vsel %vm743, %v751, %v707
      %v760 = vsel %vm744, %v752, %v714
      %v761 = vsel %vm745, %v753, %v721
      %vm762 = vcmp.ne.s32.totalorder %v754, 0
      %vm763 = vcmp.ne.s32.totalorder %v755, 0
      %vm764 = vcmp.ne.s32.totalorder %v756, 0
      %vm765 = vcmp.ne.s32.totalorder %v757, 0
      %vm766 = vcmp.ne.s32.totalorder %v758, 0
      %vm767 = vcmp.ne.s32.totalorder %v759, 0
      %vm768 = vcmp.ne.s32.totalorder %v760, 0
      %vm769 = vcmp.ne.s32.totalorder %v761, 0
      %vm770 = vcmp.ne.s32.totalorder %v754, 7
      %vm771 = vcmp.ne.s32.totalorder %v755, 7
      %vm772 = vcmp.ne.s32.totalorder %v756, 7
      %vm773 = vcmp.ne.s32.totalorder %v757, 7
      %vm774 = vcmp.ne.s32.totalorder %v758, 7
      %vm775 = vcmp.ne.s32.totalorder %v759, 7
      %vm776 = vcmp.ne.s32.totalorder %v760, 7
      %vm777 = vcmp.ne.s32.totalorder %v761, 7
      %v778 = vld [vmem:[%s3] sm:$0xff]
      %v779 = vld [vmem:[%s3 + $0x8] sm:$0x1]
      %v780 = vld [vmem:[%s4] sm:$0x1]
      %v781 = vld [vmem:[%s5] sm:$0xff]
      %v782 = vld [vmem:[%s5 + $0x8] sm:$0xff]
      %v783 = vld [vmem:[%s5 + $0x10] sm:$0xff]
      %v784 = vld [vmem:[%s5 + $0x18] sm:$0xff]
      %v785 = vld [vmem:[%s5 + $0x20] sm:$0xff]
      %v786 = vld [vmem:[%s5 + $0x28] sm:$0xff]
      %v787 = vld [vmem:[%s5 + $0x30] sm:$0xff]
      %v788 = vld [vmem:[%s5 + $0x38] sm:$0xff]
      %v789 = vld [vmem:[%s5 + $0x40] sm:$0xff]
      %v790 = vld [vmem:[%s5 + $0x48] sm:$0xff]
      %v791 = vld [vmem:[%s5 + $0x50] sm:$0xff]
      %v792 = vld [vmem:[%s5 + $0x58] sm:$0xff]
      %v793 = vld [vmem:[%s5 + $0x60] sm:$0xff]
      %v794 = vld [vmem:[%s5 + $0x68] sm:$0xff]
      %v795 = vld [vmem:[%s5 + $0x70] sm:$0xff]
      %v796 = vld [vmem:[%s5 + $0x78] sm:$0xff]
      %v797 = vld [vmem:[%s6] sm:$0x1]
      %v798 = vld [vmem:[#allocation2 + $0x8] sm:$0xff]
      %v799 = vld [vmem:[#allocation2 + $0x10] sm:$0xff]
      %v800 = vld [vmem:[#allocation2 + $0x18] sm:$0xff]
      %v801 = vld [vmem:[#allocation2 + $0x20] sm:$0xff]
      %v802 = vld [vmem:[#allocation2 + $0x28] sm:$0xff]
      %v803 = vld [vmem:[#allocation2 + $0x30] sm:$0xff]
      %v804 = vld [vmem:[#allocation2 + $0x38] sm:$0xff]
      %v805 = vld [vmem:[#allocation2 + $0x40] sm:$0xff]
      %v806 = vld [vmem:[#allocation2 + $0x7] sm:$0xff]
      %v807 = vld [vmem:[#allocation2 + $0xf] sm:$0xff]
      %v808 = vld [vmem:[#allocation2 + $0x17] sm:$0xff]
      %v809 = vld [vmem:[#allocation2 + $0x1f] sm:$0xff]
      %v810 = vld [vmem:[#allocation2 + $0x27] sm:$0xff]
      %v811 = vld [vmem:[#allocation2 + $0x2f] sm:$0xff]
      %v812 = vld [vmem:[#allocation2 + $0x37] sm:$0xff]
      %v813 = vld [vmem:[#allocation2 + $0x3f] sm:$0xff]
      %v814 = vld [vmem:[#allocation2 + $0x9] sm:$0xff]
      %v815 = vld [vmem:[#allocation2 + $0x11] sm:$0xff]
      %v816 = vld [vmem:[#allocation2 + $0x19] sm:$0xff]
      %v817 = vld [vmem:[#allocation2 + $0x21] sm:$0xff]
      %v818 = vld [vmem:[#allocation2 + $0x29] sm:$0xff]
      %v819 = vld [vmem:[#allocation2 + $0x31] sm:$0xff]
      %v820 = vld [vmem:[#allocation2 + $0x39] sm:$0xff]
      %v821 = vld [vmem:[#allocation2 + $0x41] sm:$0xff]
      %v822 = vlaneseq
      %v823 = vshrl.u32 %v822, 7
      %v824 = vsub.s32 1, %v823
      %v825 = vrot.slane %v778, %v824
      %v826 = vmul.f32 %v798, %v825
      %v827 = vmul.f32 %v799, %v825
      %v828 = vmul.f32 %v800, %v825
      %v829 = vmul.f32 %v801, %v825
      %v830 = vmul.f32 %v802, %v825
      %v831 = vmul.f32 %v803, %v825
      %v832 = vmul.f32 %v804, %v825
      %v833 = vmul.f32 %v805, %v825
      %v834 = vsel %vm762, 1, 0
      %v835 = vsel %vm763, 1, 0
      %v836 = vsel %vm764, 1, 0
      %v837 = vsel %vm765, 1, 0
      %v838 = vsel %vm766, 1, 0
      %v839 = vsel %vm767, 1, 0
      %v840 = vsel %vm768, 1, 0
      %v841 = vsel %vm769, 1, 0
      %vm842 = vcmp.eq.s32.totalorder %v834, 1
      %vm843 = vcmp.eq.s32.totalorder %v835, 1
      %vm844 = vcmp.eq.s32.totalorder %v836, 1
      %vm845 = vcmp.eq.s32.totalorder %v837, 1
      %vm846 = vcmp.eq.s32.totalorder %v838, 1
      %vm847 = vcmp.eq.s32.totalorder %v839, 1
      %vm848 = vcmp.eq.s32.totalorder %v840, 1
      %vm849 = vcmp.eq.s32.totalorder %v841, 1
      %v850 = vsel %vm842, %v806, 0.0
      %v851 = vsel %vm843, %v807, 0.0
      %v852 = vsel %vm844, %v808, 0.0
      %v853 = vsel %vm845, %v809, 0.0
      %v854 = vsel %vm846, %v810, 0.0
      %v855 = vsel %vm847, %v811, 0.0
      %v856 = vsel %vm848, %v812, 0.0
      %v857 = vsel %vm849, %v813, 0.0
      %v858 = vlaneseq
      %v859 = vshrl.u32 %v858, 7
      %v860 = vsub.s32 0, %v859
      %v861 = vrot.slane %v778, %v860
      %v862 = vmul.f32 %v850, %v861
      %v863 = vmul.f32 %v851, %v861
      %v864 = vmul.f32 %v852, %v861
      %v865 = vmul.f32 %v853, %v861
      %v866 = vmul.f32 %v854, %v861
      %v867 = vmul.f32 %v855, %v861
      %v868 = vmul.f32 %v856, %v861
      %v869 = vmul.f32 %v857, %v861
      %v870 = vadd.f32 %v826, %v862
      %v871 = vadd.f32 %v827, %v863
      %v872 = vadd.f32 %v828, %v864
      %v873 = vadd.f32 %v829, %v865
      %v874 = vadd.f32 %v830, %v866
      %v875 = vadd.f32 %v831, %v867
      %v876 = vadd.f32 %v832, %v868
      %v877 = vadd.f32 %v833, %v869
      %v878 = vsel %vm770, 1, 0
      %v879 = vsel %vm771, 1, 0
      %v880 = vsel %vm772, 1, 0
      %v881 = vsel %vm773, 1, 0
      %v882 = vsel %vm774, 1, 0
      %v883 = vsel %vm775, 1, 0
      %v884 = vsel %vm776, 1, 0
      %v885 = vsel %vm777, 1, 0
      %vm886 = vcmp.eq.s32.totalorder %v878, 1
      %vm887 = vcmp.eq.s32.totalorder %v879, 1
      %vm888 = vcmp.eq.s32.totalorder %v880, 1
      %vm889 = vcmp.eq.s32.totalorder %v881, 1
      %vm890 = vcmp.eq.s32.totalorder %v882, 1
      %vm891 = vcmp.eq.s32.totalorder %v883, 1
      %vm892 = vcmp.eq.s32.totalorder %v884, 1
      %vm893 = vcmp.eq.s32.totalorder %v885, 1
      %v894 = vsel %vm886, %v814, 0.0
      %v895 = vsel %vm887, %v815, 0.0
      %v896 = vsel %vm888, %v816, 0.0
      %v897 = vsel %vm889, %v817, 0.0
      %v898 = vsel %vm890, %v818, 0.0
      %v899 = vsel %vm891, %v819, 0.0
      %v900 = vsel %vm892, %v820, 0.0
      %v901 = vsel %vm893, %v821, 0.0
      %v902 = vlaneseq
      %v903 = vshrl.u32 %v902, 7
      %v904 = vsub.s32 2, %v903
      %v905 = vrot.slane %v778, %v904
      %v906 = vmul.f32 %v894, %v905
      %v907 = vmul.f32 %v895, %v905
      %v908 = vmul.f32 %v896, %v905
      %v909 = vmul.f32 %v897, %v905
      %v910 = vmul.f32 %v898, %v905
      %v911 = vmul.f32 %v899, %v905
      %v912 = vmul.f32 %v900, %v905
      %v913 = vmul.f32 %v901, %v905
      %v914 = vadd.f32 %v870, %v906
      %v915 = vadd.f32 %v871, %v907
      %v916 = vadd.f32 %v872, %v908
      %v917 = vadd.f32 %v873, %v909
      %v918 = vadd.f32 %v874, %v910
      %v919 = vadd.f32 %v875, %v911
      %v920 = vadd.f32 %v876, %v912
      %v921 = vadd.f32 %v877, %v913
      %v922 = vld [vmem:[#allocation2 + $0x48] sm:$0xff]
      %v923 = vld [vmem:[#allocation2 + $0x47] sm:$0xff]
      %v924 = vld [vmem:[#allocation2 + $0x49] sm:$0xff]
      %v925 = vlaneseq
      %v926 = vshrl.u32 %v925, 7
      %v927 = vsub.s32 4, %v926
      %v928 = vrot.slane %v778, %v927
      %v929 = vmul.f32 %v799, %v928
      %v930 = vmul.f32 %v800, %v928
      %v931 = vmul.f32 %v801, %v928
      %v932 = vmul.f32 %v802, %v928
      %v933 = vmul.f32 %v803, %v928
      %v934 = vmul.f32 %v804, %v928
      %v935 = vmul.f32 %v805, %v928
      %v936 = vmul.f32 %v922, %v928
      %v937 = vsel %vm842, %v807, 0.0
      %v938 = vsel %vm843, %v808, 0.0
      %v939 = vsel %vm844, %v809, 0.0
      %v940 = vsel %vm845, %v810, 0.0
      %v941 = vsel %vm846, %v811, 0.0
      %v942 = vsel %vm847, %v812, 0.0
      %v943 = vsel %vm848, %v813, 0.0
      %v944 = vsel %vm849, %v923, 0.0
      %v945 = vlaneseq
      %v946 = vshrl.u32 %v945, 7
      %v947 = vsub.s32 3, %v946
      %v948 = vrot.slane %v778, %v947
      %v949 = vmul.f32 %v937, %v948
      %v950 = vmul.f32 %v938, %v948
      %v951 = vmul.f32 %v939, %v948
      %v952 = vmul.f32 %v940, %v948
      %v953 = vmul.f32 %v941, %v948
      %v954 = vmul.f32 %v942, %v948
      %v955 = vmul.f32 %v943, %v948
      %v956 = vmul.f32 %v944, %v948
      %v957 = vadd.f32 %v929, %v949
      %v958 = vadd.f32 %v930, %v950
      %v959 = vadd.f32 %v931, %v951
      %v960 = vadd.f32 %v932, %v952
      %v961 = vadd.f32 %v933, %v953
      %v962 = vadd.f32 %v934, %v954
      %v963 = vadd.f32 %v935, %v955
      %v964 = vadd.f32 %v936, %v956
      %v965 = vsel %vm886, %v815, 0.0
      %v966 = vsel %vm887, %v816, 0.0
      %v967 = vsel %vm888, %v817, 0.0
      %v968 = vsel %vm889, %v818, 0.0
      %v969 = vsel %vm890, %v819, 0.0
      %v970 = vsel %vm891, %v820, 0.0
      %v971 = vsel %vm892, %v821, 0.0
      %v972 = vsel %vm893, %v924, 0.0
      %v973 = vlaneseq
      %v974 = vshrl.u32 %v973, 7
      %v975 = vsub.s32 5, %v974
      %v976 = vrot.slane %v778, %v975
      %v977 = vmul.f32 %v965, %v976
      %v978 = vmul.f32 %v966, %v976
      %v979 = vmul.f32 %v967, %v976
      %v980 = vmul.f32 %v968, %v976
      %v981 = vmul.f32 %v969, %v976
      %v982 = vmul.f32 %v970, %v976
      %v983 = vmul.f32 %v971, %v976
      %v984 = vmul.f32 %v972, %v976
      %v985 = vadd.f32 %v957, %v977
      %v986 = vadd.f32 %v958, %v978
      %v987 = vadd.f32 %v959, %v979
      %v988 = vadd.f32 %v960, %v980
      %v989 = vadd.f32 %v961, %v981
      %v990 = vadd.f32 %v962, %v982
      %v991 = vadd.f32 %v963, %v983
      %v992 = vadd.f32 %v964, %v984
      %v993 = vadd.f32 %v914, %v985
      %v994 = vadd.f32 %v915, %v986
      %v995 = vadd.f32 %v916, %v987
      %v996 = vadd.f32 %v917, %v988
      %v997 = vadd.f32 %v918, %v989
      %v998 = vadd.f32 %v919, %v990
      %v999 = vadd.f32 %v920, %v991
      %v1000 = vadd.f32 %v921, %v992
      %v1001 = vld [vmem:[#allocation2 + $0x50] sm:$0xff]
      %v1002 = vld [vmem:[#allocation2 + $0x4f] sm:$0xff]
      %v1003 = vld [vmem:[#allocation2 + $0x51] sm:$0xff]
      %v1004 = vlaneseq
      %v1005 = vshrl.u32 %v1004, 7
      %v1006 = vsub.s32 7, %v1005
      %v1007 = vrot.slane %v778, %v1006
      %v1008 = vmul.f32 %v800, %v1007
      %v1009 = vmul.f32 %v801, %v1007
      %v1010 = vmul.f32 %v802, %v1007
      %v1011 = vmul.f32 %v803, %v1007
      %v1012 = vmul.f32 %v804, %v1007
      %v1013 = vmul.f32 %v805, %v1007
      %v1014 = vmul.f32 %v922, %v1007
      %v1015 = vmul.f32 %v1001, %v1007
      %v1016 = vsel %vm842, %v808, 0.0
      %v1017 = vsel %vm843, %v809, 0.0
      %v1018 = vsel %vm844, %v810, 0.0
      %v1019 = vsel %vm845, %v811, 0.0
      %v1020 = vsel %vm846, %v812, 0.0
      %v1021 = vsel %vm847, %v813, 0.0
      %v1022 = vsel %vm848, %v923, 0.0
      %v1023 = vsel %vm849, %v1002, 0.0
      %v1024 = vlaneseq
      %v1025 = vshrl.u32 %v1024, 7
      %v1026 = vsub.s32 6, %v1025
      %v1027 = vrot.slane %v778, %v1026
      %v1028 = vmul.f32 %v1016, %v1027
      %v1029 = vmul.f32 %v1017, %v1027
      %v1030 = vmul.f32 %v1018, %v1027
      %v1031 = vmul.f32 %v1019, %v1027
      %v1032 = vmul.f32 %v1020, %v1027
      %v1033 = vmul.f32 %v1021, %v1027
      %v1034 = vmul.f32 %v1022, %v1027
      %v1035 = vmul.f32 %v1023, %v1027
      %v1036 = vadd.f32 %v1008, %v1028
      %v1037 = vadd.f32 %v1009, %v1029
      %v1038 = vadd.f32 %v1010, %v1030
      %v1039 = vadd.f32 %v1011, %v1031
      %v1040 = vadd.f32 %v1012, %v1032
      %v1041 = vadd.f32 %v1013, %v1033
      %v1042 = vadd.f32 %v1014, %v1034
      %v1043 = vadd.f32 %v1015, %v1035
      %v1044 = vsel %vm886, %v816, 0.0
      %v1045 = vsel %vm887, %v817, 0.0
      %v1046 = vsel %vm888, %v818, 0.0
      %v1047 = vsel %vm889, %v819, 0.0
      %v1048 = vsel %vm890, %v820, 0.0
      %v1049 = vsel %vm891, %v821, 0.0
      %v1050 = vsel %vm892, %v924, 0.0
      %v1051 = vsel %vm893, %v1003, 0.0
      %v1052 = vlaneseq
      %v1053 = vshrl.u32 %v1052, 7
      %v1054 = vsub.s32 0, %v1053
      %v1055 = vrot.slane %v779, %v1054
      %v1056 = vmul.f32 %v1044, %v1055
      %v1057 = vmul.f32 %v1045, %v1055
      %v1058 = vmul.f32 %v1046, %v1055
      %v1059 = vmul.f32 %v1047, %v1055
      %v1060 = vmul.f32 %v1048, %v1055
      %v1061 = vmul.f32 %v1049, %v1055
      %v1062 = vmul.f32 %v1050, %v1055
      %v1063 = vmul.f32 %v1051, %v1055
      %v1064 = vadd.f32 %v1036, %v1056
      %v1065 = vadd.f32 %v1037, %v1057
      %v1066 = vadd.f32 %v1038, %v1058
      %v1067 = vadd.f32 %v1039, %v1059
      %v1068 = vadd.f32 %v1040, %v1060
      %v1069 = vadd.f32 %v1041, %v1061
      %v1070 = vadd.f32 %v1042, %v1062
      %v1071 = vadd.f32 %v1043, %v1063
      %v1072 = vadd.f32 %v993, %v1064
      %v1073 = vadd.f32 %v994, %v1065
      %v1074 = vadd.f32 %v995, %v1066
      %v1075 = vadd.f32 %v996, %v1067
      %v1076 = vadd.f32 %v997, %v1068
      %v1077 = vadd.f32 %v998, %v1069
      %v1078 = vadd.f32 %v999, %v1070
      %v1079 = vadd.f32 %v1000, %v1071
      %v1081 = vlaneseq
      %v1082 = vshrl.u32 %v1081, 7
      %v1083 = vsub.s32 0, %v1082
      %v1084 = vrot.slane %v780, %v1083
      %v1086 = vadd.f32 %v1072, %v1084
      %v1087 = vadd.f32 %v1073, %v1084
      %v1088 = vadd.f32 %v1074, %v1084
      %v1089 = vadd.f32 %v1075, %v1084
      %v1090 = vadd.f32 %v1076, %v1084
      %v1091 = vadd.f32 %v1077, %v1084
      %v1092 = vadd.f32 %v1078, %v1084
      %v1093 = vadd.f32 %v1079, %v1084
      %v1094 = vmul.f32 %v1086, 0.5
      %v1095 = vmul.f32 %v1087, 0.5
      %v1096 = vmul.f32 %v1088, 0.5
      %v1097 = vmul.f32 %v1089, 0.5
      %v1098 = vmul.f32 %v1090, 0.5
      %v1099 = vmul.f32 %v1091, 0.5
      %v1100 = vmul.f32 %v1092, 0.5
      %v1101 = vmul.f32 %v1093, 0.5
      %v1102 = vmul.f32 %v1086, 0.70710677
      %v1103 = vmul.f32 %v1087, 0.70710677
      %v1104 = vmul.f32 %v1088, 0.70710677
      %v1105 = vmul.f32 %v1089, 0.70710677
      %v1106 = vmul.f32 %v1090, 0.70710677
      %v1107 = vmul.f32 %v1091, 0.70710677
      %v1108 = vmul.f32 %v1092, 0.70710677
      %v1109 = vmul.f32 %v1093, 0.70710677
      %v1110 = vand.u32 2147483647, %v1102
      %v1111 = vand.u32 2147483647, %v1103
      %v1112 = vand.u32 2147483647, %v1104
      %v1113 = vand.u32 2147483647, %v1105
      %v1114 = vand.u32 2147483647, %v1106
      %v1115 = vand.u32 2147483647, %v1107
      %v1116 = vand.u32 2147483647, %v1108
      %v1117 = vand.u32 2147483647, %v1109
      %v1118 = vmul.f32 %v1110, 0.3275911
      %v1119 = vmul.f32 %v1111, 0.3275911
      %v1120 = vmul.f32 %v1112, 0.3275911
      %v1121 = vmul.f32 %v1113, 0.3275911
      %v1122 = vmul.f32 %v1114, 0.3275911
      %v1123 = vmul.f32 %v1115, 0.3275911
      %v1124 = vmul.f32 %v1116, 0.3275911
      %v1125 = vmul.f32 %v1117, 0.3275911
      %v1126 = vadd.f32 %v1118, 1.0
      %v1127 = vadd.f32 %v1119, 1.0
      %v1128 = vadd.f32 %v1120, 1.0
      %v1129 = vadd.f32 %v1121, 1.0
      %v1130 = vadd.f32 %v1122, 1.0
      %v1131 = vadd.f32 %v1123, 1.0
      %v1132 = vadd.f32 %v1124, 1.0
      %v1133 = vadd.f32 %v1125, 1.0
      %v1134 = vrcp.pop %v1126
      %v1135 = vmul.f32 1.0, %v1134
      %v1136 = vrcp.pop %v1127
      %v1137 = vmul.f32 1.0, %v1136
      %v1138 = vrcp.pop %v1128
      %v1139 = vmul.f32 1.0, %v1138
      %v1140 = vrcp.pop %v1129
      %v1141 = vmul.f32 1.0, %v1140
      %v1142 = vrcp.pop %v1130
      %v1143 = vmul.f32 1.0, %v1142
      %v1144 = vrcp.pop %v1131
      %v1145 = vmul.f32 1.0, %v1144
      %v1146 = vrcp.pop %v1132
      %v1147 = vmul.f32 1.0, %v1146
      %v1148 = vrcp.pop %v1133
      %v1149 = vmul.f32 1.0, %v1148
      %v1150 = vmul.f32 %v1135, 1.0614054
      %v1151 = vmul.f32 %v1137, 1.0614054
      %v1152 = vmul.f32 %v1139, 1.0614054
      %v1153 = vmul.f32 %v1141, 1.0614054
      %v1154 = vmul.f32 %v1143, 1.0614054
      %v1155 = vmul.f32 %v1145, 1.0614054
      %v1156 = vmul.f32 %v1147, 1.0614054
      %v1157 = vmul.f32 %v1149, 1.0614054
      %v1158 = vadd.f32 %v1150, -1.4531521
      %v1159 = vadd.f32 %v1151, -1.4531521
      %v1160 = vadd.f32 %v1152, -1.4531521
      %v1161 = vadd.f32 %v1153, -1.4531521
      %v1162 = vadd.f32 %v1154, -1.4531521
      %v1163 = vadd.f32 %v1155, -1.4531521
      %v1164 = vadd.f32 %v1156, -1.4531521
      %v1165 = vadd.f32 %v1157, -1.4531521
      %v1166 = vmul.f32 %v1158, %v1135
      %v1167 = vmul.f32 %v1159, %v1137
      %v1168 = vmul.f32 %v1160, %v1139
      %v1169 = vmul.f32 %v1161, %v1141
      %v1170 = vmul.f32 %v1162, %v1143
      %v1171 = vmul.f32 %v1163, %v1145
      %v1172 = vmul.f32 %v1164, %v1147
      %v1173 = vmul.f32 %v1165, %v1149
      %v1174 = vadd.f32 %v1166, 1.4214138
      %v1175 = vadd.f32 %v1167, 1.4214138
      %v1176 = vadd.f32 %v1168, 1.4214138
      %v1177 = vadd.f32 %v1169, 1.4214138
      %v1178 = vadd.f32 %v1170, 1.4214138
      %v1179 = vadd.f32 %v1171, 1.4214138
      %v1180 = vadd.f32 %v1172, 1.4214138
      %v1181 = vadd.f32 %v1173, 1.4214138
      %v1182 = vmul.f32 %v1174, %v1135
      %v1183 = vmul.f32 %v1175, %v1137
      %v1184 = vmul.f32 %v1176, %v1139
      %v1185 = vmul.f32 %v1177, %v1141
      %v1186 = vmul.f32 %v1178, %v1143
      %v1187 = vmul.f32 %v1179, %v1145
      %v1188 = vmul.f32 %v1180, %v1147
      %v1189 = vmul.f32 %v1181, %v1149
      %v1190 = vadd.f32 %v1182, -0.28449672
      %v1191 = vadd.f32 %v1183, -0.28449672
      %v1192 = vadd.f32 %v1184, -0.28449672
      %v1193 = vadd.f32 %v1185, -0.28449672
      %v1194 = vadd.f32 %v1186, -0.28449672
      %v1195 = vadd.f32 %v1187, -0.28449672
      %v1196 = vadd.f32 %v1188, -0.28449672
      %v1197 = vadd.f32 %v1189, -0.28449672
      %v1198 = vmul.f32 %v1190, %v1135
      %v1199 = vmul.f32 %v1191, %v1137
      %v1200 = vmul.f32 %v1192, %v1139
      %v1201 = vmul.f32 %v1193, %v1141
      %v1202 = vmul.f32 %v1194, %v1143
      %v1203 = vmul.f32 %v1195, %v1145
      %v1204 = vmul.f32 %v1196, %v1147
      %v1205 = vmul.f32 %v1197, %v1149
      %v1206 = vadd.f32 %v1198, 0.2548296
      %v1207 = vadd.f32 %v1199, 0.2548296
      %v1208 = vadd.f32 %v1200, 0.2548296
      %v1209 = vadd.f32 %v1201, 0.2548296
      %v1210 = vadd.f32 %v1202, 0.2548296
      %v1211 = vadd.f32 %v1203, 0.2548296
      %v1212 = vadd.f32 %v1204, 0.2548296
      %v1213 = vadd.f32 %v1205, 0.2548296
      %v1214 = vmul.f32 %v1206, %v1135
      %v1215 = vmul.f32 %v1207, %v1137
      %v1216 = vmul.f32 %v1208, %v1139
      %v1217 = vmul.f32 %v1209, %v1141
      %v1218 = vmul.f32 %v1210, %v1143
      %v1219 = vmul.f32 %v1211, %v1145
      %v1220 = vmul.f32 %v1212, %v1147
      %v1221 = vmul.f32 %v1213, %v1149
      %v1222 = vsub.f32 0.0, %v1110
      %v1223 = vsub.f32 0.0, %v1111
      %v1224 = vsub.f32 0.0, %v1112
      %v1225 = vsub.f32 0.0, %v1113
      %v1226 = vsub.f32 0.0, %v1114
      %v1227 = vsub.f32 0.0, %v1115
      %v1228 = vsub.f32 0.0, %v1116
      %v1229 = vsub.f32 0.0, %v1117
      %v1230 = vmul.f32 %v1222, %v1110
      %v1231 = vmul.f32 %v1223, %v1111
      %v1232 = vmul.f32 %v1224, %v1112
      %v1233 = vmul.f32 %v1225, %v1113
      %v1234 = vmul.f32 %v1226, %v1114
      %v1235 = vmul.f32 %v1227, %v1115
      %v1236 = vmul.f32 %v1228, %v1116
      %v1237 = vmul.f32 %v1229, %v1117
      %v1238 = vmul.f32 %v1230, 1.442695
      %v1239 = vpow.pop %v1238
      %v1240 = vmul.f32 %v1231, 1.442695
      %v1241 = vpow.pop %v1240
      %v1242 = vmul.f32 %v1232, 1.442695
      %v1243 = vpow.pop %v1242
      %v1244 = vmul.f32 %v1233, 1.442695
      %v1245 = vpow.pop %v1244
      %v1246 = vmul.f32 %v1234, 1.442695
      %v1247 = vpow.pop %v1246
      %v1248 = vmul.f32 %v1235, 1.442695
      %v1249 = vpow.pop %v1248
      %v1250 = vmul.f32 %v1236, 1.442695
      %v1251 = vpow.pop %v1250
      %v1252 = vmul.f32 %v1237, 1.442695
      %v1253 = vpow.pop %v1252
      %v1254 = vmul.f32 %v1214, %v1239
      %v1255 = vmul.f32 %v1215, %v1241
      %v1256 = vmul.f32 %v1216, %v1243
      %v1257 = vmul.f32 %v1217, %v1245
      %v1258 = vmul.f32 %v1218, %v1247
      %v1259 = vmul.f32 %v1219, %v1249
      %v1260 = vmul.f32 %v1220, %v1251
      %v1261 = vmul.f32 %v1221, %v1253
      %v1262 = vsub.f32 1.0, %v1254
      %v1263 = vsub.f32 1.0, %v1255
      %v1264 = vsub.f32 1.0, %v1256
      %v1265 = vsub.f32 1.0, %v1257
      %v1266 = vsub.f32 1.0, %v1258
      %v1267 = vsub.f32 1.0, %v1259
      %v1268 = vsub.f32 1.0, %v1260
      %v1269 = vsub.f32 1.0, %v1261
      %vm1270 = vcmp.ge.f32.partialorder %v1102, 0.0
      %vm1271 = vcmp.ge.f32.partialorder %v1103, 0.0
      %vm1272 = vcmp.ge.f32.partialorder %v1104, 0.0
      %vm1273 = vcmp.ge.f32.partialorder %v1105, 0.0
      %vm1274 = vcmp.ge.f32.partialorder %v1106, 0.0
      %vm1275 = vcmp.ge.f32.partialorder %v1107, 0.0
      %vm1276 = vcmp.ge.f32.partialorder %v1108, 0.0
      %vm1277 = vcmp.ge.f32.partialorder %v1109, 0.0
      %v1278 = vsub.f32 0.0, %v1262
      %v1279 = vsub.f32 0.0, %v1263
      %v1280 = vsub.f32 0.0, %v1264
      %v1281 = vsub.f32 0.0, %v1265
      %v1282 = vsub.f32 0.0, %v1266
      %v1283 = vsub.f32 0.0, %v1267
      %v1284 = vsub.f32 0.0, %v1268
      %v1285 = vsub.f32 0.0, %v1269
      %v1286 = vsel %vm1270, %v1262, %v1278
      %v1287 = vsel %vm1271, %v1263, %v1279
      %v1288 = vsel %vm1272, %v1264, %v1280
      %v1289 = vsel %vm1273, %v1265, %v1281
      %v1290 = vsel %vm1274, %v1266, %v1282
      %v1291 = vsel %vm1275, %v1267, %v1283
      %v1292 = vsel %vm1276, %v1268, %v1284
      %v1293 = vsel %vm1277, %v1269, %v1285
      %v1294 = vadd.f32 %v1286, 1.0
      %v1295 = vadd.f32 %v1287, 1.0
      %v1296 = vadd.f32 %v1288, 1.0
      %v1297 = vadd.f32 %v1289, 1.0
      %v1298 = vadd.f32 %v1290, 1.0
      %v1299 = vadd.f32 %v1291, 1.0
      %v1300 = vadd.f32 %v1292, 1.0
      %v1301 = vadd.f32 %v1293, 1.0
      %v1302 = vmul.f32 %v1094, %v1294
      %v1303 = vmul.f32 %v1095, %v1295
      %v1304 = vmul.f32 %v1096, %v1296
      %v1305 = vmul.f32 %v1097, %v1297
      %v1306 = vmul.f32 %v1098, %v1298
      %v1307 = vmul.f32 %v1099, %v1299
      %v1308 = vmul.f32 %v1100, %v1300
      %v1309 = vmul.f32 %v1101, %v1301
      %v1311 = vlaneseq
      %v1312 = vshrl.u32 %v1311, 7
      %v1313 = vsub.s32 0, %v1312
      %v1314 = vrot.slane %v797, %v1313
      %1316 = vmatprep.subr.mxu0 0.0
      %1317 = vmatpush1.msra.mxu0 %v781
      %1318 = vmatprep.subr.mxu0 0.0
      %1319 = vmatpush1.msra.mxu0 %v782
      %1320 = vmatprep.subr.mxu0 0.0
      %1321 = vmatpush1.msra.mxu0 %v783
      %1322 = vmatprep.subr.mxu0 0.0
      %1323 = vmatpush1.msra.mxu0 %v784
      %1324 = vmatprep.subr.mxu0 0.0
      %1325 = vmatpush1.msra.mxu0 %v785
      %1326 = vmatprep.subr.mxu0 0.0
      %1327 = vmatpush1.msra.mxu0 %v786
      %1328 = vmatprep.subr.mxu0 0.0
      %1329 = vmatpush1.msra.mxu0 %v787
      %1330 = vmatprep.subr.mxu0 0.0
      %1331 = vmatpush1.msra.mxu0 %v788
      %1332 = vmatprep.subr.mxu0 0.0
      %1333 = vmatpush1.msra.mxu0 %v789
      %1334 = vmatprep.subr.mxu0 0.0
      %1335 = vmatpush1.msra.mxu0 %v790
      %1336 = vmatprep.subr.mxu0 0.0
      %1337 = vmatpush1.msra.mxu0 %v791
      %1338 = vmatprep.subr.mxu0 0.0
      %1339 = vmatpush1.msra.mxu0 %v792
      %1340 = vmatprep.subr.mxu0 0.0
      %1341 = vmatpush1.msra.mxu0 %v793
      %1342 = vmatprep.subr.mxu0 0.0
      %1343 = vmatpush1.msra.mxu0 %v794
      %1344 = vmatprep.subr.mxu0 0.0
      %1345 = vmatpush1.msra.mxu0 %v795
      %1346 = vmatprep.subr.mxu0 0.0
      %1347 = vmatpush1.msra.mxu0 %v796
      %1348 = vmatprep.subr.mxu0 0.0
      %1349 = vmatpush1.msra.mxu0 0.0
      %1350 = vmatprep.subr.mxu0 0.0
      %1351 = vmatpush1.msra.mxu0 0.0
      %1352 = vmatprep.subr.mxu0 0.0
      %1353 = vmatpush1.msra.mxu0 0.0
      %1354 = vmatprep.subr.mxu0 0.0
      %1355 = vmatpush1.msra.mxu0 0.0
      %1356 = vmatprep.subr.mxu0 0.0
      %1357 = vmatpush1.msra.mxu0 0.0
      %1358 = vmatprep.subr.mxu0 0.0
      %1359 = vmatpush1.msra.mxu0 0.0
      %1360 = vmatprep.subr.mxu0 0.0
      %1361 = vmatpush1.msra.mxu0 0.0
      %1362 = vmatprep.subr.mxu0 0.0
      %1363 = vmatpush1.msra.mxu0 0.0
      %1364 = vmatprep.subr.mxu0 0.0
      %1365 = vmatpush1.msra.mxu0 0.0
      %1366 = vmatprep.subr.mxu0 0.0
      %1367 = vmatpush1.msra.mxu0 0.0
      %1368 = vmatprep.subr.mxu0 0.0
      %1369 = vmatpush1.msra.mxu0 0.0
      %1370 = vmatprep.subr.mxu0 0.0
      %1371 = vmatpush1.msra.mxu0 0.0
      %1372 = vmatprep.subr.mxu0 0.0
      %1373 = vmatpush1.msra.mxu0 0.0
      %1374 = vmatprep.subr.mxu0 0.0
      %1375 = vmatpush1.msra.mxu0 0.0
      %1376 = vmatprep.subr.mxu0 0.0
      %1377 = vmatpush1.msra.mxu0 0.0
      %1378 = vmatprep.subr.mxu0 0.0
      %1379 = vmatpush1.msra.mxu0 0.0
      %1380 = vmatprep.mubr.f32.mxu0 0.0
      %1381 = vmatmul.mubr.f32.gmra.mrb[0].mxu0 %v1302
      %v1382 = vpop.f32.mrb[0].mxu0
      %v1383 = vadd.f32 %v1314, %v1382
      %v1384 = vpop.f32.mrb[0].mxu0
      %1385 = vmatprep.mubr.f32.mxu0 0.0
      %1386 = vmatmul.mubr.f32.gmra.mrb[0].mxu0 %v1303
      %v1387 = vpop.f32.mrb[0].mxu0
      %v1388 = vadd.f32 %v1314, %v1387
      %v1389 = vpop.f32.mrb[0].mxu0
      %1390 = vmatprep.mubr.f32.mxu0 0.0
      %1391 = vmatmul.mubr.f32.gmra.mrb[0].mxu0 %v1304
      %v1392 = vpop.f32.mrb[0].mxu0
      %v1393 = vadd.f32 %v1314, %v1392
      %v1394 = vpop.f32.mrb[0].mxu0
      %1395 = vmatprep.mubr.f32.mxu0 0.0
      %1396 = vmatmul.mubr.f32.gmra.mrb[0].mxu0 %v1305
      %v1397 = vpop.f32.mrb[0].mxu0
      %v1398 = vadd.f32 %v1314, %v1397
      %v1399 = vpop.f32.mrb[0].mxu0
      %1400 = vmatprep.mubr.f32.mxu0 0.0
      %1401 = vmatmul.mubr.f32.gmra.mrb[0].mxu0 %v1306
      %v1402 = vpop.f32.mrb[0].mxu0
      %v1403 = vadd.f32 %v1314, %v1402
      %v1404 = vpop.f32.mrb[0].mxu0
      %1405 = vmatprep.mubr.f32.mxu0 0.0
      %1406 = vmatmul.mubr.f32.gmra.mrb[0].mxu0 %v1307
      %v1407 = vpop.f32.mrb[0].mxu0
      %v1408 = vadd.f32 %v1314, %v1407
      %v1409 = vpop.f32.mrb[0].mxu0
      %1410 = vmatprep.mubr.f32.mxu0 0.0
      %1411 = vmatmul.mubr.f32.gmra.mrb[0].mxu0 %v1308
      %v1412 = vpop.f32.mrb[0].mxu0
      %v1413 = vadd.f32 %v1314, %v1412
      %v1414 = vpop.f32.mrb[0].mxu0
      %1415 = vmatprep.mubr.f32.mxu0 0.0
      %1416 = vmatmul.mubr.f32.gmra.mrb[0].mxu0 %v1309
      %v1417 = vpop.f32.mrb[0].mxu0
      %v1418 = vadd.f32 %v1314, %v1417
      %v1419 = vpop.f32.mrb[0].mxu0
      %1420 = vdwg.mxu0
      %1421 = vst.msk [vmem:[%s280] sm:$0xff] %vm299, %v1383
      %1422 = vst.msk [vmem:[%s280 + $0x8] sm:$0xff] %vm299, %v1388
      %1423 = vst.msk [vmem:[%s280 + $0x10] sm:$0xff] %vm299, %v1393
      %1424 = vst.msk [vmem:[%s280 + $0x18] sm:$0xff] %vm299, %v1398
      %1425 = vst.msk [vmem:[%s280 + $0x20] sm:$0xff] %vm299, %v1403
      %1426 = vst.msk [vmem:[%s280 + $0x28] sm:$0xff] %vm299, %v1408
      %1427 = vst.msk [vmem:[%s280 + $0x30] sm:$0xff] %vm299, %v1413
      %1428 = vst.msk [vmem:[%s280 + $0x38] sm:$0xff] %vm299, %v1418
      %s1429 = smul.u32 8, %s18
      %p1430 = scmp.lt.s32.totalorder %s1429, 15
      %s1431 = scalar_select %p1430, %s1429, 15
      %s1432 = smul.addr %s1431, 8
      %s1433 = scalar_lea.vmem %s7, %s1432
      // Predicated region
      $region49: #{tpu_custom_call.1} parent=47 // pred_check
        %p1434 = pneg %p188
      $region50: #{tpu_custom_call.1} parent=47 // pred_check_branch
        %1436 = sbr.rel (%p1434) target = $region52
      $region51: #{tpu_custom_call.1} parent=47 // pred_region
        %s1437 = smul.u32 8, %s18
      $region52: #{tpu_custom_call.1} parent=47 // pred_fallthru
        _
    $region48: #{tpu_custom_call.1} parent=5 // pred_fallthru
      _
    %p1438 = scmp.le.s32.totalorder 2, %s13
    // Predicated region
    $region53: #{tpu_custom_call.1} parent=5 // pred_check
      %p1439 = pneg %p1438
    $region54: #{tpu_custom_call.1} parent=5 // pred_check_branch
      %1441 = sbr.rel (%p1439) target = $region56
    $region55: #{tpu_custom_call.1} parent=5 // pred_region
      %s1442 = ssub.s32 %s13, 2
      // Predicated region
      $region57: #{tpu_custom_call.1} parent=55 // pred_check
        %p1443 = pneg %p194
      $region58: #{tpu_custom_call.1} parent=55 // pred_check_branch
        %1445 = sbr.rel (%p1443) target = $region60
      $region59: #{tpu_custom_call.1} parent=55 // pred_region
        %s1446 = smul.u32 8, %s19
        %p1447 = scmp.lt.s32.totalorder %s1446, 15
        %s1448 = scalar_select %p1447, %s1446, 15
        %s1449 = smul.addr %s1448, 8
        %s1450 = scalar_lea.vmem %s7, %s1449
      $region60: #{tpu_custom_call.1} parent=55 // pred_fallthru
        _
    $region56: #{tpu_custom_call.1} parent=5 // pred_fallthru
      _
  $region6: #{tpu_custom_call.1} parent=0 // loop_footer
    %s17 = sadd.s32 1, %s13
  $region7: #{tpu_custom_call.1} parent=0 // loop_footer_branch
    %12 = sbr.rel target = $region3
  $region8: #{tpu_custom_call.1} parent=0 // loop_exit
    _

</llo_original>
